<compile_context>
chip_gen: v5e
topology: v5e:2x2
jax: 0.10.0
libtpu: 0.0.40
codegen_flags: <defaults>
</compile_context>

<pallas_src>
import functools

import jax
import jax.numpy as jnp
import numpy as np
from jax import lax
from jax.experimental import pallas as pl
from jax.experimental.pallas import tpu as pltpu

_NEG_BIG = -1e30


def _magnn_kernel(alpha, D, H,
                  x_ref, m_ref, wrot_ref, wa_ref, wat_ref,
                  ft_ref, maxs_ref, denom_ref):
    p = pl.program_id(1)          # phase: 0 = per-node max, 1 = aggregate
    e = pl.program_id(2)          # edge tile
    n_e = pl.num_programs(2)

    x = x_ref[...]                # (tE, L*D) lane-dense metapath-instance slab
    m = m_ref[...]                # (tN, tE)  dense one-hot: m[n, e] = 1 iff dst(e) == n

    @pl.when(jnp.logical_and(p == 0, e == 0))
    def _init_max():
        maxs_ref[...] = jnp.full(maxs_ref.shape, _NEG_BIG, jnp.float32)

    @pl.when(p == 0)
    def _phase0():
        # logits with edges on the LANE axis (natural layout vs. m), leaky-relu'd
        a_t = lax.dot_general(wat_ref[...], x,
                              dimension_numbers=(((1,), (1,)), ((), ())),
                              preferred_element_type=jnp.float32)        # (H, tE)
        a_t = jnp.where(a_t >= 0, a_t, alpha * a_t)
        cols = []
        for h in range(H):                                               # H is small & static
            masked_h = jnp.where(m > 0.5, a_t[h:h + 1, :], _NEG_BIG)     # (tN, tE)
            cols.append(jnp.max(masked_h, axis=1, keepdims=True))        # (tN, 1)
        tile_max = jnp.concatenate(cols, axis=1)                         # (tN, H)
        maxs_ref[...] = jnp.maximum(maxs_ref[...], tile_max)

    @pl.when(jnp.logical_and(p == 1, e == 0))
    def _init_acc():
        denom_ref[...] = jnp.zeros_like(denom_ref)
        ft_ref[...] = jnp.zeros_like(ft_ref)

    @pl.when(p == 1)
    def _phase1():
        # folded rotation + mean:  hidden = x @ w_rot
        hidden = jnp.dot(x, wrot_ref[...],
                         preferred_element_type=jnp.float32)             # (tE, D)
        # folded attention logits (a1 + a2 in one matmul), leaky-relu'd
        a = jnp.dot(x, wa_ref[...], preferred_element_type=jnp.float32)  # (tE, H)
        a = jnp.where(a >= 0, a, alpha * a)
        # per-edge gather of the destination's max:  M^T @ maxs
        amax_e = lax.dot_general(m, maxs_ref[...],
                                 dimension_numbers=(((0,), (0,)), ((), ())),
                                 preferred_element_type=jnp.float32)     # (tE, H)
        # clamp keeps edges whose dst is outside this node tile finite (they only
        # hit zero columns of m, so they contribute nothing).
        pexp = jnp.exp(jnp.minimum(a - amax_e, 0.0))                     # (tE, H)
        denom_ref[...] += jnp.dot(m, pexp,
                                  preferred_element_type=jnp.float32)    # (tN, H)
        # head-major, lane-dense weighted features -> single (tN, H*D) aggregation matmul
        weighted = jnp.concatenate(
            [pexp[:, h:h + 1] * hidden for h in range(H)], axis=1)       # (tE, H*D)
        ft_ref[...] += jnp.dot(m, weighted,
                               preferred_element_type=jnp.float32)       # (tN, H*D)

    @pl.when(jnp.logical_and(p == 1, e == n_e - 1))
    def _finalize():
        denom = denom_ref[...]
        inv = jnp.where(denom > 0.0, 1.0 / denom, 0.0)                   # guard empty nodes
        ft = ft_ref[...]
        ft_ref[...] = jnp.concatenate(
            [ft[:, h * D:(h + 1) * D] * inv[:, h:h + 1] for h in range(H)],
            axis=1)


def _final_rvec(rvec, etypes, L, D):
    """Cumulative RotatE0 rotation per metapath position (tiny host-side glue)."""
    rv = rvec / jnp.linalg.norm(rvec, axis=2, keepdims=True)              # (R, D//2, 2)
    rv2 = jnp.stack([rv, rv], axis=1)                                     # (R, 2, D//2, 2)
    rv2 = rv2.at[:, 1, :, 1].multiply(-1.0)
    rv2 = rv2.reshape(rvec.shape[0] * 2, D // 2, 2)                       # (2R, D//2, 2)

    final = [None] * L
    final[L - 1] = jnp.concatenate(
        [jnp.ones((D // 2, 1), jnp.float32), jnp.zeros((D // 2, 1), jnp.float32)],
        axis=1)
    for i in range(L - 2, -1, -1):
        if etypes[i] is not None:
            r = rv2[etypes[i]]
            re = final[i + 1][:, 0] * r[:, 0] - final[i + 1][:, 1] * r[:, 1]
            im = final[i + 1][:, 0] * r[:, 1] + final[i + 1][:, 1] * r[:, 0]
            final[i] = jnp.stack([re, im], axis=1)
        else:
            final[i] = final[i + 1]
    return jnp.stack(final, axis=0)                                       # (L, D//2, 2)


def _fold_weights(rvec, etypes, attn1_w, attn2, L, D, H):
    """Fold RotatE rotation + mean-over-L and the attention projections into matrices."""
    fr = _final_rvec(rvec.astype(jnp.float32), etypes, L, D)              # (L, D//2, 2)
    c, s = fr[..., 0], fr[..., 1]                                         # (L, D//2)
    k = jnp.arange(D // 2)
    blocks = jnp.zeros((L, D, D), jnp.float32)
    blocks = blocks.at[:, 2 * k, 2 * k].set(c)
    blocks = blocks.at[:, 2 * k + 1, 2 * k].set(-s)
    blocks = blocks.at[:, 2 * k, 2 * k + 1].set(s)
    blocks = blocks.at[:, 2 * k + 1, 2 * k + 1].set(c)
    w_rot = blocks.reshape(L * D, D) / L                                  # hidden = x @ w_rot

    w1t = attn1_w.T.astype(jnp.float32)                                   # (D, H)
    a2t = attn2.reshape(H, D).T.astype(jnp.float32)                       # (D, H)
    w_a = jnp.zeros((L * D, H), jnp.float32).at[(L - 1) * D:, :].set(w1t)
    w_a = w_a + jnp.matmul(w_rot, a2t, precision=lax.Precision.HIGHEST)   # a = x @ w_a
    return w_rot, w_a


def magnn_mptype_forward(node_features, mpinstances, etypes, rvec, iftargets,
                         attn1_w, attn2, nhead, alpha=0.01,
                         tile_e=128, tile_n=None):
    """JAX/Pallas equivalent of MAGNN_mptype_layer.forward (rtype='RotatE0', dropout=0)."""
    E, L = mpinstances.shape
    N, D = node_features.shape
    H = nhead
    LD = L * D

    # --- glue: gather metapath-instance features (lane-dense slab) + one-hot dst ---
    x = node_features[mpinstances].astype(jnp.float32).reshape(E, LD)     # (E, L*D)
    dst = mpinstances[:, -1]
    m = (jnp.arange(N)[:, None] == dst[None, :]).astype(jnp.float32)      # (N, E)

    w_rot, w_a = _fold_weights(rvec, etypes, attn1_w, attn2, L, D, H)     # (LD,D), (LD,H)
    w_a_t = w_a.T                                                         # (H, LD)

    # --- tiling ---
    tE = tile_e if (tile_e <= E and E % tile_e == 0) else E
    tN = N if tile_n is None else tile_n
    assert N % tN == 0
    nE, nN = E // tE, N // tN

    grid_spec = pltpu.PrefetchScalarGridSpec(
        num_scalar_prefetch=0,
        grid=(nN, 2, nE),                                 # (node tile, phase, edge tile)
        in_specs=[
            pl.BlockSpec((tE, LD), lambda n, p, e: (e, 0)),     # x slab
            pl.BlockSpec((tN, tE), lambda n, p, e: (n, e)),     # one-hot M
            pl.BlockSpec((LD, D), lambda n, p, e: (0, 0)),      # w_rot
            pl.BlockSpec((LD, H), lambda n, p, e: (0, 0)),      # w_a
            pl.BlockSpec((H, LD), lambda n, p, e: (0, 0)),      # w_a^T
        ],
        out_specs=pl.BlockSpec((tN, H * D), lambda n, p, e: (n, 0)),
        scratch_shapes=[
            pltpu.VMEM((tN, H), jnp.float32),   # per-node running max
            pltpu.VMEM((tN, H), jnp.float32),   # per-node softmax denominator
        ],
    )

    kernel = functools.partial(_magnn_kernel, alpha, D, H)
    ft_flat = pl.pallas_call(
        kernel,
        out_shape=jax.ShapeDtypeStruct((N, H * D), jnp.float32),
        grid_spec=grid_spec,
        compiler_params=pltpu.CompilerParams(
            dimension_semantics=("parallel", "arbitrary", "arbitrary"),
            vmem_limit_bytes=32 * 1024 * 1024,
        ),
    )(x, m, w_rot, w_a, w_a_t)

    ft = ft_flat.reshape(N, H, D)                                         # g.ndata['ft']

    targets = np.where(np.asarray(iftargets)[:, 1] == 1)[0]
    return jnp.asarray(np.asarray(iftargets)[targets, 0]), ft[targets]


# ----------------------------- pure-JAX reference -----------------------------
def _reference(node_features, mpinstances, etypes, rvec, iftargets,
               attn1_w, attn2, nhead, alpha=0.01):
    E, L = mpinstances.shape
    N, D = node_features.shape
    H = nhead
    edata = node_features[mpinstances].astype(jnp.float32)                # (E, L, D)
    center = edata[:, -1, :]

    fr = _final_rvec(rvec.astype(jnp.float32), etypes, L, D)              # (L, D//2, 2)
    ed = edata.reshape(E, L, D // 2, 2)
    rows = []
    for i in range(L):
        if i < L - 1:
            re = ed[:, i, :, 0] * fr[i, :, 0] - ed[:, i, :, 1] * fr[i, :, 1]
            im = ed[:, i, :, 0] * fr[i, :, 1] + ed[:, i, :, 1] * fr[i, :, 0]
            rows.append(jnp.stack([re, im], axis=-1))
        else:
            rows.append(ed[:, i])
    ed = jnp.stack(rows, axis=1).reshape(E, L, D)

    hidden = jnp.mean(ed, axis=1)                                         # (E, D)
    eft = jnp.tile(hidden[:, None, :], (1, H, 1))                         # (E, H, D)
    a1 = center @ attn1_w.T                                               # (E, H)
    a2 = (eft * attn2).sum(-1)                                            # (E, H)
    a = a1 + a2
    a = jnp.where(a >= 0, a, alpha * a)

    dst = mpinstances[:, -1]
    amax = jax.ops.segment_max(a, dst, num_segments=N)
    exp_a = jnp.exp(a - amax[dst])
    denom = jax.ops.segment_sum(exp_a, dst, num_segments=N)
    attn = exp_a / denom[dst]                                             # (E, H)
    ft = jax.ops.segment_sum(attn[:, :, None] * eft, dst, num_segments=N)  # (N, H, D)

    targets = np.where(np.asarray(iftargets)[:, 1] == 1)[0]
    return jnp.asarray(np.asarray(iftargets)[targets, 0]), ft[targets]


if __name__ == "__main__":
    # deterministic small problem: odim=32, nhead=4 (H*D = 128 lane-dense output),
    # metapath length 4 (L*D = 128 lane-dense slab), 16 nodes, 256 metapath instances
    # tiled as 2 edge tiles of 128 -> grid (1 node tile, 2 phases, 2 edge tiles).
    odim, nhead, L, num_nodes, E, R = 32, 4, 4, 16, 256, 3
    alpha = 0.01

    key = jax.random.PRNGKey(0)
    k1, k2, k3, k4, k5 = jax.random.split(key, 5)

    node_features = jax.random.normal(k1, (num_nodes, odim), jnp.float32)
    mpinstances = jax.random.randint(k2, (E, L), 0, num_nodes, jnp.int32)
    rvec = jax.random.normal(k3, (R, odim // 2, 2), jnp.float32)           # RotatE relation vecs
    attn1_w = 0.1 * jax.random.normal(k4, (nhead, odim), jnp.float32)      # attn1.weight (H, D)
    attn2 = 0.1 * jax.random.normal(k5, (1, nhead, odim), jnp.float32)     # attn2        (1, H, D)
    etypes = [0, None, 3]                                                  # indices into doubled rvec

    flags = (np.arange(num_nodes) % 3 != 1).astype(np.int64)
    iftargets = np.stack([np.arange(100, 100 + num_nodes), flags], axis=1).astype(np.int64)

    ids, feats = magnn_mptype_forward(node_features, mpinstances, etypes, rvec,
                                      iftargets, attn1_w, attn2, nhead, alpha,
                                      tile_e=128)
    feats = jax.block_until_ready(feats)

    ref_ids, ref_feats = _reference(node_features, mpinstances, etypes, rvec,
                                    iftargets, attn1_w, attn2, nhead, alpha)
    np.testing.assert_array_equal(np.asarray(ids), np.asarray(ref_ids))
    np.testing.assert_allclose(np.asarray(feats), np.asarray(ref_feats),
                               rtol=1e-4, atol=1e-4)
    print("KERNEL_OK")
</pallas_src>

<mosaic_0001>
module attributes {stable_mosaic.version = 11 : i64} {
  func.func @_magnn_kernel(%arg0: i32, %arg1: i32, %arg2: i32, %arg3: memref<128x128xf32, #tpu.memory_space<vmem>>, %arg4: memref<16x128xf32, #tpu.memory_space<vmem>>, %arg5: memref<128x32xf32, #tpu.memory_space<vmem>>, %arg6: memref<128x4xf32, #tpu.memory_space<vmem>>, %arg7: memref<4x128xf32, #tpu.memory_space<vmem>>, %arg8: memref<16x128xf32, #tpu.memory_space<vmem>>, %arg9: memref<16x4xf32, #tpu.memory_space<vmem>>, %arg10: memref<16x4xf32, #tpu.memory_space<vmem>>) attributes {dimension_semantics = [#tpu.dimension_semantics<parallel>, #tpu.dimension_semantics<arbitrary>, #tpu.dimension_semantics<arbitrary>], iteration_bounds = array<i64: 1, 2, 2>, scalar_prefetch = 0 : i64, scratch_operands = 2 : i64, tpu.core_type = #tpu.core_type<tc>, window_params = [{transform_indices = @transform_0, window_bounds = array<i64: 128, 128>}, {transform_indices = @transform_1, window_bounds = array<i64: 16, 128>}, {pipeline_mode = #tpu.pipeline_mode<synchronous>, transform_indices = @transform_2, window_bounds = array<i64: 128, 32>}, {pipeline_mode = #tpu.pipeline_mode<synchronous>, transform_indices = @transform_3, window_bounds = array<i64: 128, 4>}, {pipeline_mode = #tpu.pipeline_mode<synchronous>, transform_indices = @transform_4, window_bounds = array<i64: 4, 128>}, {transform_indices = @transform_5, window_bounds = array<i64: 16, 128>}]} {
    %c0 = arith.constant 0 : index
    %c0_0 = arith.constant 0 : index
    %0 = vector.load %arg3[%c0, %c0_0] : memref<128x128xf32, #tpu.memory_space<vmem>>, vector<128x128xf32>
    %c0_1 = arith.constant 0 : index
    %c0_2 = arith.constant 0 : index
    %1 = vector.load %arg4[%c0_1, %c0_2] : memref<16x128xf32, #tpu.memory_space<vmem>>, vector<16x128xf32>
    %c0_i32 = arith.constant 0 : i32
    %2 = arith.cmpi eq, %arg1, %c0_i32 : i32
    %c0_i32_3 = arith.constant 0 : i32
    %3 = arith.cmpi eq, %arg2, %c0_i32_3 : i32
    %4 = arith.andi %2, %3 : i1
    %5 = arith.extui %4 : i1 to i32
    %c0_i32_4 = arith.constant 0 : i32
    %6 = arith.cmpi ne, %5, %c0_i32_4 : i32
    scf.if %6 {
      %cst = arith.constant -1.000000e+30 : f32
      %23 = vector.broadcast %cst : f32 to vector<16x4xf32>
      %c0_14 = arith.constant 0 : index
      %c0_15 = arith.constant 0 : index
      %24 = vector.load %arg9[%c0_14, %c0_15] : memref<16x4xf32, #tpu.memory_space<vmem>>, vector<16x4xf32>
      tpu.vector_store %arg9[%c0_14, %c0_15], %23 {strides = array<i32>} : memref<16x4xf32, #tpu.memory_space<vmem>>, vector<16x4xf32>,
    } else {
    }
    %c0_i32_5 = arith.constant 0 : i32
    %7 = arith.cmpi eq, %arg1, %c0_i32_5 : i32
    %8 = arith.extui %7 : i1 to i32
    %c0_i32_6 = arith.constant 0 : i32
    %9 = arith.cmpi ne, %8, %c0_i32_6 : i32
    scf.if %9 {
      %c0_14 = arith.constant 0 : index
      %c0_15 = arith.constant 0 : index
      %23 = vector.load %arg7[%c0_14, %c0_15] : memref<4x128xf32, #tpu.memory_space<vmem>>, vector<4x128xf32>
      %cst = arith.constant dense<0.000000e+00> : vector<4x128xf32>
      %24 = tpu.matmul %23, %0, %cst {dimension_numbers = #tpu.dot_dimension_numbers<[1], [1], [0], [0], [0, 0, 1, 0], [], []>} : vector<4x128xf32>, vector<128x128xf32>, vector<4x128xf32> -> vector<4x128xf32>
      %cst_16 = arith.constant 0.000000e+00 : f32
      %25 = vector.broadcast %cst_16 : f32 to vector<4x128xf32>
      %26 = arith.cmpf oge, %24, %25 : vector<4x128xf32>
      %cst_17 = arith.constant 0.00999999977 : f32
      %27 = vector.broadcast %cst_17 : f32 to vector<4x128xf32>
      %28 = arith.mulf %27, %24 : vector<4x128xf32>
      %29 = arith.select %26, %24, %28 : vector<4x128xi1>, vector<4x128xf32>
      %cst_18 = arith.constant 5.000000e-01 : f32
      %30 = vector.broadcast %cst_18 : f32 to vector<16x128xf32>
      %31 = arith.cmpf ogt, %1, %30 : vector<16x128xf32>
      %32 = vector.extract_strided_slice %29 {offsets = [0, 0], sizes = [1, 128], strides = [1, 1]} : vector<4x128xf32> to vector<1x128xf32>
      %cst_19 = arith.constant -1.000000e+30 : f32
      %33 = vector.shape_cast %32 : vector<1x128xf32> to vector<1x128xf32>
      %34 = vector.broadcast %33 : vector<1x128xf32> to vector<16x128xf32>
      %35 = vector.broadcast %cst_19 : f32 to vector<16x128xf32>
      %36 = arith.select %31, %34, %35 : vector<16x128xi1>, vector<16x128xf32>
      %cst_20 = arith.constant dense<0xFF800000> : vector<16xf32>
      %37 = vector.multi_reduction <maximumf>, %36, %cst_20 [1] : vector<16x128xf32> to vector<16xf32>
      %38 = vector.shape_cast %37 : vector<16xf32> to vector<16x1xf32>
      %cst_21 = arith.constant 5.000000e-01 : f32
      %39 = vector.broadcast %cst_21 : f32 to vector<16x128xf32>
      %40 = arith.cmpf ogt, %1, %39 : vector<16x128xf32>
      %41 = vector.extract_strided_slice %29 {offsets = [1, 0], sizes = [1, 128], strides = [1, 1]} : vector<4x128xf32> to vector<1x128xf32>
      %cst_22 = arith.constant -1.000000e+30 : f32
      %42 = vector.shape_cast %41 : vector<1x128xf32> to vector<1x128xf32>
      %43 = vector.broadcast %42 : vector<1x128xf32> to vector<16x128xf32>
      %44 = vector.broadcast %cst_22 : f32 to vector<16x128xf32>
      %45 = arith.select %40, %43, %44 : vector<16x128xi1>, vector<16x128xf32>
      %cst_23 = arith.constant dense<0xFF800000> : vector<16xf32>
      %46 = vector.multi_reduction <maximumf>, %45, %cst_23 [1] : vector<16x128xf32> to vector<16xf32>
      %47 = vector.shape_cast %46 : vector<16xf32> to vector<16x1xf32>
      %cst_24 = arith.constant 5.000000e-01 : f32
      %48 = vector.broadcast %cst_24 : f32 to vector<16x128xf32>
      %49 = arith.cmpf ogt, %1, %48 : vector<16x128xf32>
      %50 = vector.extract_strided_slice %29 {offsets = [2, 0], sizes = [1, 128], strides = [1, 1]} : vector<4x128xf32> to vector<1x128xf32>
      %cst_25 = arith.constant -1.000000e+30 : f32
      %51 = vector.shape_cast %50 : vector<1x128xf32> to vector<1x128xf32>
      %52 = vector.broadcast %51 : vector<1x128xf32> to vector<16x128xf32>
      %53 = vector.broadcast %cst_25 : f32 to vector<16x128xf32>
      %54 = arith.select %49, %52, %53 : vector<16x128xi1>, vector<16x128xf32>
      %cst_26 = arith.constant dense<0xFF800000> : vector<16xf32>
      %55 = vector.multi_reduction <maximumf>, %54, %cst_26 [1] : vector<16x128xf32> to vector<16xf32>
      %56 = vector.shape_cast %55 : vector<16xf32> to vector<16x1xf32>
      %cst_27 = arith.constant 5.000000e-01 : f32
      %57 = vector.broadcast %cst_27 : f32 to vector<16x128xf32>
      %58 = arith.cmpf ogt, %1, %57 : vector<16x128xf32>
      %59 = vector.extract_strided_slice %29 {offsets = [3, 0], sizes = [1, 128], strides = [1, 1]} : vector<4x128xf32> to vector<1x128xf32>
      %cst_28 = arith.constant -1.000000e+30 : f32
      %60 = vector.shape_cast %59 : vector<1x128xf32> to vector<1x128xf32>
      %61 = vector.broadcast %60 : vector<1x128xf32> to vector<16x128xf32>
      %62 = vector.broadcast %cst_28 : f32 to vector<16x128xf32>
      %63 = arith.select %58, %61, %62 : vector<16x128xi1>, vector<16x128xf32>
      %cst_29 = arith.constant dense<0xFF800000> : vector<16xf32>
      %64 = vector.multi_reduction <maximumf>, %63, %cst_29 [1] : vector<16x128xf32> to vector<16xf32>
      %65 = vector.shape_cast %64 : vector<16xf32> to vector<16x1xf32>
      %66 = tpu.concatenate %38, %47, %56, %65 in 1 : vector<16x1xf32>, vector<16x1xf32>, vector<16x1xf32>, vector<16x1xf32> -> vector<16x4xf32>
      %c0_30 = arith.constant 0 : index
      %c0_31 = arith.constant 0 : index
      %67 = vector.load %arg9[%c0_30, %c0_31] : memref<16x4xf32, #tpu.memory_space<vmem>>, vector<16x4xf32>
      %68 = arith.maximumf %67, %66 : vector<16x4xf32>
      %c0_32 = arith.constant 0 : index
      %c0_33 = arith.constant 0 : index
      %69 = vector.load %arg9[%c0_32, %c0_33] : memref<16x4xf32, #tpu.memory_space<vmem>>, vector<16x4xf32>
      tpu.vector_store %arg9[%c0_32, %c0_33], %68 {strides = array<i32>} : memref<16x4xf32, #tpu.memory_space<vmem>>, vector<16x4xf32>,
    } else {
    }
    %c1_i32 = arith.constant 1 : i32
    %10 = arith.cmpi eq, %arg1, %c1_i32 : i32
    %c0_i32_7 = arith.constant 0 : i32
    %11 = arith.cmpi eq, %arg2, %c0_i32_7 : i32
    %12 = arith.andi %10, %11 : i1
    %13 = arith.extui %12 : i1 to i32
    %c0_i32_8 = arith.constant 0 : i32
    %14 = arith.cmpi ne, %13, %c0_i32_8 : i32
    scf.if %14 {
      %cst = arith.constant 0.000000e+00 : f32
      %23 = vector.broadcast %cst : f32 to vector<16x4xf32>
      %c0_14 = arith.constant 0 : index
      %c0_15 = arith.constant 0 : index
      %24 = vector.load %arg10[%c0_14, %c0_15] : memref<16x4xf32, #tpu.memory_space<vmem>>, vector<16x4xf32>
      tpu.vector_store %arg10[%c0_14, %c0_15], %23 {strides = array<i32>} : memref<16x4xf32, #tpu.memory_space<vmem>>, vector<16x4xf32>,
      %cst_16 = arith.constant 0.000000e+00 : f32
      %25 = vector.broadcast %cst_16 : f32 to vector<16x128xf32>
      %c0_17 = arith.constant 0 : index
      %c0_18 = arith.constant 0 : index
      %26 = vector.load %arg8[%c0_17, %c0_18] : memref<16x128xf32, #tpu.memory_space<vmem>>, vector<16x128xf32>
      tpu.vector_store %arg8[%c0_17, %c0_18], %25 {strides = array<i32>} : memref<16x128xf32, #tpu.memory_space<vmem>>, vector<16x128xf32>,
    } else {
    }
    %c1_i32_9 = arith.constant 1 : i32
    %15 = arith.cmpi eq, %arg1, %c1_i32_9 : i32
    %16 = arith.extui %15 : i1 to i32
    %c0_i32_10 = arith.constant 0 : i32
    %17 = arith.cmpi ne, %16, %c0_i32_10 : i32
    scf.if %17 {
      %c0_14 = arith.constant 0 : index
      %c0_15 = arith.constant 0 : index
      %23 = vector.load %arg5[%c0_14, %c0_15] : memref<128x32xf32, #tpu.memory_space<vmem>>, vector<128x32xf32>
      %cst = arith.constant dense<0.000000e+00> : vector<128x32xf32>
      %24 = tpu.matmul %0, %23, %cst {dimension_numbers = #tpu.dot_dimension_numbers<[1], [0], [0], [1], [0, 0, 1, 1], [], []>} : vector<128x128xf32>, vector<128x32xf32>, vector<128x32xf32> -> vector<128x32xf32>
      %c0_16 = arith.constant 0 : index
      %c0_17 = arith.constant 0 : index
      %25 = vector.load %arg6[%c0_16, %c0_17] : memref<128x4xf32, #tpu.memory_space<vmem>>, vector<128x4xf32>
      %cst_18 = arith.constant dense<0.000000e+00> : vector<128x4xf32>
      %26 = tpu.matmul %0, %25, %cst_18 {dimension_numbers = #tpu.dot_dimension_numbers<[1], [0], [0], [1], [0, 0, 1, 1], [], []>} : vector<128x128xf32>, vector<128x4xf32>, vector<128x4xf32> -> vector<128x4xf32>
      %cst_19 = arith.constant 0.000000e+00 : f32
      %27 = vector.broadcast %cst_19 : f32 to vector<128x4xf32>
      %28 = arith.cmpf oge, %26, %27 : vector<128x4xf32>
      %cst_20 = arith.constant 0.00999999977 : f32
      %29 = vector.broadcast %cst_20 : f32 to vector<128x4xf32>
      %30 = arith.mulf %29, %26 : vector<128x4xf32>
      %31 = arith.select %28, %26, %30 : vector<128x4xi1>, vector<128x4xf32>
      %c0_21 = arith.constant 0 : index
      %c0_22 = arith.constant 0 : index
      %32 = vector.load %arg9[%c0_21, %c0_22] : memref<16x4xf32, #tpu.memory_space<vmem>>, vector<16x4xf32>
      %cst_23 = arith.constant dense<0.000000e+00> : vector<128x4xf32>
      %33 = tpu.matmul %1, %32, %cst_23 {dimension_numbers = #tpu.dot_dimension_numbers<[0], [0], [1], [1], [0, 1, 1, 1], [], []>} : vector<16x128xf32>, vector<16x4xf32>, vector<128x4xf32> -> vector<128x4xf32>
      %34 = arith.subf %31, %33 : vector<128x4xf32>
      %cst_24 = arith.constant 0.000000e+00 : f32
      %35 = vector.broadcast %cst_24 : f32 to vector<128x4xf32>
      %36 = arith.minimumf %34, %35 : vector<128x4xf32>
      %37 = math.exp %36 : vector<128x4xf32>
      %c0_25 = arith.constant 0 : index
      %c0_26 = arith.constant 0 : index
      %38 = vector.load %arg10[%c0_25, %c0_26] : memref<16x4xf32, #tpu.memory_space<vmem>>, vector<16x4xf32>
      %cst_27 = arith.constant dense<0.000000e+00> : vector<16x4xf32>
      %39 = tpu.matmul %1, %37, %cst_27 {dimension_numbers = #tpu.dot_dimension_numbers<[1], [0], [0], [1], [0, 0, 1, 1], [], []>} : vector<16x128xf32>, vector<128x4xf32>, vector<16x4xf32> -> vector<16x4xf32>
      %40 = arith.addf %38, %39 : vector<16x4xf32>
      %c0_28 = arith.constant 0 : index
      %c0_29 = arith.constant 0 : index
      %41 = vector.load %arg10[%c0_28, %c0_29] : memref<16x4xf32, #tpu.memory_space<vmem>>, vector<16x4xf32>
      tpu.vector_store %arg10[%c0_28, %c0_29], %40 {strides = array<i32>} : memref<16x4xf32, #tpu.memory_space<vmem>>, vector<16x4xf32>,
      %42 = vector.extract_strided_slice %37 {offsets = [0, 0], sizes = [128, 1], strides = [1, 1]} : vector<128x4xf32> to vector<128x1xf32>
      %43 = vector.broadcast %42 : vector<128x1xf32> to vector<128x32xf32>
      %44 = arith.mulf %43, %24 : vector<128x32xf32>
      %45 = vector.extract_strided_slice %37 {offsets = [0, 1], sizes = [128, 1], strides = [1, 1]} : vector<128x4xf32> to vector<128x1xf32>
      %46 = vector.broadcast %45 : vector<128x1xf32> to vector<128x32xf32>
      %47 = arith.mulf %46, %24 : vector<128x32xf32>
      %48 = vector.extract_strided_slice %37 {offsets = [0, 2], sizes = [128, 1], strides = [1, 1]} : vector<128x4xf32> to vector<128x1xf32>
      %49 = vector.broadcast %48 : vector<128x1xf32> to vector<128x32xf32>
      %50 = arith.mulf %49, %24 : vector<128x32xf32>
      %51 = vector.extract_strided_slice %37 {offsets = [0, 3], sizes = [128, 1], strides = [1, 1]} : vector<128x4xf32> to vector<128x1xf32>
      %52 = vector.broadcast %51 : vector<128x1xf32> to vector<128x32xf32>
      %53 = arith.mulf %52, %24 : vector<128x32xf32>
      %54 = tpu.concatenate %44, %47, %50, %53 in 1 : vector<128x32xf32>, vector<128x32xf32>, vector<128x32xf32>, vector<128x32xf32> -> vector<128x128xf32>
      %c0_30 = arith.constant 0 : index
      %c0_31 = arith.constant 0 : index
      %55 = vector.load %arg8[%c0_30, %c0_31] : memref<16x128xf32, #tpu.memory_space<vmem>>, vector<16x128xf32>
      %cst_32 = arith.constant dense<0.000000e+00> : vector<16x128xf32>
      %56 = tpu.matmul %1, %54, %cst_32 {dimension_numbers = #tpu.dot_dimension_numbers<[1], [0], [0], [1], [0, 0, 1, 1], [], []>} : vector<16x128xf32>, vector<128x128xf32>, vector<16x128xf32> -> vector<16x128xf32>
      %57 = arith.addf %55, %56 : vector<16x128xf32>
      %c0_33 = arith.constant 0 : index
      %c0_34 = arith.constant 0 : index
      %58 = vector.load %arg8[%c0_33, %c0_34] : memref<16x128xf32, #tpu.memory_space<vmem>>, vector<16x128xf32>
      tpu.vector_store %arg8[%c0_33, %c0_34], %57 {strides = array<i32>} : memref<16x128xf32, #tpu.memory_space<vmem>>, vector<16x128xf32>,
    } else {
    }
    %c1_i32_11 = arith.constant 1 : i32
    %18 = arith.cmpi eq, %arg1, %c1_i32_11 : i32
    %c1_i32_12 = arith.constant 1 : i32
    %19 = arith.cmpi eq, %arg2, %c1_i32_12 : i32
    %20 = arith.andi %18, %19 : i1
    %21 = arith.extui %20 : i1 to i32
    %c0_i32_13 = arith.constant 0 : i32
    %22 = arith.cmpi ne, %21, %c0_i32_13 : i32
    scf.if %22 {
      %c0_14 = arith.constant 0 : index
      %c0_15 = arith.constant 0 : index
      %23 = vector.load %arg10[%c0_14, %c0_15] : memref<16x4xf32, #tpu.memory_space<vmem>>, vector<16x4xf32>
      %cst = arith.constant 0.000000e+00 : f32
      %24 = vector.broadcast %cst : f32 to vector<16x4xf32>
      %25 = arith.cmpf ogt, %23, %24 : vector<16x4xf32>
      %cst_16 = arith.constant 1.000000e+00 : f32
      %26 = vector.broadcast %cst_16 : f32 to vector<16x4xf32>
      %27 = arith.divf %26, %23 : vector<16x4xf32>
      %cst_17 = arith.constant 0.000000e+00 : f32
      %28 = vector.broadcast %cst_17 : f32 to vector<16x4xf32>
      %29 = arith.select %25, %27, %28 : vector<16x4xi1>, vector<16x4xf32>
      %c0_18 = arith.constant 0 : index
      %c0_19 = arith.constant 0 : index
      %30 = vector.load %arg8[%c0_18, %c0_19] : memref<16x128xf32, #tpu.memory_space<vmem>>, vector<16x128xf32>
      %31 = vector.extract_strided_slice %30 {offsets = [0, 0], sizes = [16, 32], strides = [1, 1]} : vector<16x128xf32> to vector<16x32xf32>
      %32 = vector.extract_strided_slice %29 {offsets = [0, 0], sizes = [16, 1], strides = [1, 1]} : vector<16x4xf32> to vector<16x1xf32>
      %33 = vector.broadcast %32 : vector<16x1xf32> to vector<16x32xf32>
      %34 = arith.mulf %31, %33 : vector<16x32xf32>
      %35 = vector.extract_strided_slice %30 {offsets = [0, 32], sizes = [16, 32], strides = [1, 1]} : vector<16x128xf32> to vector<16x32xf32>
      %36 = vector.extract_strided_slice %29 {offsets = [0, 1], sizes = [16, 1], strides = [1, 1]} : vector<16x4xf32> to vector<16x1xf32>
      %37 = vector.broadcast %36 : vector<16x1xf32> to vector<16x32xf32>
      %38 = arith.mulf %35, %37 : vector<16x32xf32>
      %39 = vector.extract_strided_slice %30 {offsets = [0, 64], sizes = [16, 32], strides = [1, 1]} : vector<16x128xf32> to vector<16x32xf32>
      %40 = vector.extract_strided_slice %29 {offsets = [0, 2], sizes = [16, 1], strides = [1, 1]} : vector<16x4xf32> to vector<16x1xf32>
      %41 = vector.broadcast %40 : vector<16x1xf32> to vector<16x32xf32>
      %42 = arith.mulf %39, %41 : vector<16x32xf32>
      %43 = vector.extract_strided_slice %30 {offsets = [0, 96], sizes = [16, 32], strides = [1, 1]} : vector<16x128xf32> to vector<16x32xf32>
      %44 = vector.extract_strided_slice %29 {offsets = [0, 3], sizes = [16, 1], strides = [1, 1]} : vector<16x4xf32> to vector<16x1xf32>
      %45 = vector.broadcast %44 : vector<16x1xf32> to vector<16x32xf32>
      %46 = arith.mulf %43, %45 : vector<16x32xf32>
      %47 = tpu.concatenate %34, %38, %42, %46 in 1 : vector<16x32xf32>, vector<16x32xf32>, vector<16x32xf32>, vector<16x32xf32> -> vector<16x128xf32>
      %c0_20 = arith.constant 0 : index
      %c0_21 = arith.constant 0 : index
      %48 = vector.load %arg8[%c0_20, %c0_21] : memref<16x128xf32, #tpu.memory_space<vmem>>, vector<16x128xf32>
      tpu.vector_store %arg8[%c0_20, %c0_21], %47 {strides = array<i32>} : memref<16x128xf32, #tpu.memory_space<vmem>>, vector<16x128xf32>,
    } else {
    }
    return
  }
  func.func @transform_0(%arg0: i32, %arg1: i32, %arg2: i32) -> (i32, i32) {
    %c0_i32 = arith.constant 0 : i32
    %c0_i32_0 = arith.constant 0 : i32
    return %arg2, %c0_i32 : i32, i32
  }
  func.func @transform_1(%arg0: i32, %arg1: i32, %arg2: i32) -> (i32, i32) {
    %c0_i32 = arith.constant 0 : i32
    return %arg0, %arg2 : i32, i32
  }
  func.func @transform_2(%arg0: i32, %arg1: i32, %arg2: i32) -> (i32, i32) {
    %c0_i32 = arith.constant 0 : i32
    %c0_i32_0 = arith.constant 0 : i32
    %c0_i32_1 = arith.constant 0 : i32
    return %c0_i32, %c0_i32_0 : i32, i32
  }
  func.func @transform_3(%arg0: i32, %arg1: i32, %arg2: i32) -> (i32, i32) {
    %c0_i32 = arith.constant 0 : i32
    %c0_i32_0 = arith.constant 0 : i32
    %c0_i32_1 = arith.constant 0 : i32
    return %c0_i32, %c0_i32_0 : i32, i32
  }
  func.func @transform_4(%arg0: i32, %arg1: i32, %arg2: i32) -> (i32, i32) {
    %c0_i32 = arith.constant 0 : i32
    %c0_i32_0 = arith.constant 0 : i32
    %c0_i32_1 = arith.constant 0 : i32
    return %c0_i32, %c0_i32_0 : i32, i32
  }
  func.func @transform_5(%arg0: i32, %arg1: i32, %arg2: i32) -> (i32, i32) {
    %c0_i32 = arith.constant 0 : i32
    %c0_i32_0 = arith.constant 0 : i32
    return %arg0, %c0_i32 : i32, i32
  }
}

</mosaic_0001>

<llo_original>
// kernel: tpu_custom_call.1
$region0: #{tpu_custom_call.1}
  #allocation0 [shape = 'u32[]', space=smem, size = 0x4, offset = 0x4, fixed_abs, tag = 'smem constant byte address 0x4 - core index']
  #allocation1 [shape = 'u32[72,128]{1,0:T(1,128)}', space=vmem, size = 0x9000, scoped, tag = 'internal scratch']
  #allocation2 [shape = 'f32[16,4]{1,0:T(8,128)}', space=vmem, size = 0x2000, scoped, tag = 'scratch operand']
  #allocation3 [shape = 'f32[16,4]{1,0:T(8,128)}', space=vmem, size = 0x2000, scoped, tag = 'scratch operand']
  %s0 = inlined_call_operand.vmem [shape: f32[256,128], index: 0, kind: input, shape index: {}]
  %s1 = inlined_call_operand.vmem [shape: f32[16,256], index: 1, kind: input, shape index: {}]
  %s2 = inlined_call_operand.vmem [shape: f32[128,32], index: 2, kind: input, shape index: {}]
  %s3 = inlined_call_operand.vmem [shape: f32[128,4], index: 3, kind: input, shape index: {}]
  %s4 = inlined_call_operand.hbm [shape: f32[4,128], index: 4, kind: input, shape index: {}]
  %s5 = inlined_call_operand.hbm [shape: f32[16,128], index: 5, kind: output, shape index: {}]
  %s6 = sld [smem:[#allocation0]]
  $region115: #{tpu_custom_call.1} parent=0
    _
  %s8 = ssub.s32 1, %s6
  %s9 = scalar_select 0, %s8, %s6
  $region1: #{tpu_custom_call.1} parent=0
    #allocation4 [shape = 'u8[16384]{0}', space=vmem, size = 0x4000, scoped, tag = 'input window, operand 1']
    #allocation5 [shape = 'u8[2048]{0}', space=vmem, size = 0x800, scoped, tag = 'input window, operand 4, single buffered']
    #allocation6 [shape = 's32[2]{0}', space=sflag, size = 0x8, scoped, tag = 'scoped memory for tpu_custom_call.1']
    #allocation7 [shape = 's32[2]{0}', space=sflag, size = 0x8, scoped, tag = 'scoped memory for tpu_custom_call.1']
    #allocation8 [shape = 'u8[8192]{0}', space=vmem, size = 0x2000, scoped, tag = 'output window, operand 0, single buffered']
    %10 = vsyncpa [#allocation6], 0
    %11 = vsyncpa [#allocation7], 0
    loop: start=0, step=1, limit=6
    $region2: #{tpu_custom_call.1} parent=1 // loop_pre_header
      _
    $region3: #{tpu_custom_call.1} parent=1 // loop_header
      %s13 = sphi 0, %s17
      %p14 = scmp.ge.s32.totalorder %s13, 6
      %s20 = sphi 0, %s39
      %s21 = sphi 0, %s35
      %s22 = sphi 0, %s31
      %s23 = sphi 0, %s20
      %s24 = sphi 0, %s21
      %s25 = sphi 0, %s22
      %s26 = sphi 0, %s23
      %s27 = sphi 0, %s24
      %s28 = sphi 0, %s25
      %s42 = sphi 0, %s44
      %s45 = sphi 0, %s42
      %s46 = sphi 0, %s45
      %s62 = sphi 0, %s46
      %s70 = sphi 0, %s72
      %s73 = sphi 0, %s70
      %s74 = sphi 0, %s73
      %s90 = sphi 0, %s74
      %s94 = sphi 0, %s94
      %s96 = sphi 0, %s94
      %s97 = sphi 0, %s96
      %s111 = sphi 0, %s97
      %s115 = sphi 0, %s115
      %s117 = sphi 0, %s115
      %s118 = sphi 0, %s117
      %s132 = sphi 0, %s118
      %s136 = sphi 0, %s136
      %s138 = sphi 0, %s136
      %s139 = sphi 0, %s138
      %s153 = sphi 0, %s139
      %s159 = sphi 0, %s161
      %s162 = sphi 0, %s159
      %s163 = sphi 0, %s162
      %s179 = sphi 0, %s163
    $region4: #{tpu_custom_call.1} parent=1 // loop_header_branch
      %16 = sbr.rel (%p14) target = $region8
    $region5: #{tpu_custom_call.1} parent=1 // loop_body
      %s18 = ssub.s32 %s13, 1
      %s19 = ssub.s32 %s13, 2
      %s29 = sadd.s32 1, %s22
      %p30 = scmp.ge.s32.totalorder %s29, 2
      %s31 = scalar_select %p30, 0, %s29
      %s32 = sadd.s32 1, %s21
      %s33 = scalar_select %p30, %s32, %s21
      %p34 = scmp.ge.s32.totalorder %s33, 2
      %s35 = scalar_select %p34, 0, %s33
      %s36 = sadd.s32 1, %s20
      %s37 = scalar_select %p34, %s36, %s20
      %p38 = scmp.ge.s32.totalorder %s37, 1
      %s39 = scalar_select %p38, 0, %s37
      %s40 = ssub.s32 %s22, %s31
      %p41 = scmp.eq.s32.totalorder %s40, 0
      %s43 = sadd.s32 %s42, 1
      %s44 = scalar_select %p41, %s42, %s43
      %p47 = pneg %p41
      %p48 = scmp.eq.s32.totalorder %s13, 3
      %p49 = por %p47, %p48
      %p50 = scmp.ne.s32.totalorder %s42, %s45
      %p51 = scmp.eq.s32.totalorder %s13, 0
      %p52 = por %p50, %p51
      %p53 = scmp.ne.s32.totalorder %s42, %s45
      %p54 = scmp.eq.s32.totalorder %s18, 3
      %p55 = por %p53, %p54
      %p56 = scmp.ne.s32.totalorder %s45, %s46
      %p57 = scmp.eq.s32.totalorder %s18, 0
      %p58 = por %p56, %p57
      %p59 = scmp.ne.s32.totalorder %s45, %s46
      %p60 = scmp.eq.s32.totalorder %s19, 3
      %p61 = por %p59, %p60
      %p63 = scmp.ne.s32.totalorder %s46, %s62
      %p64 = scmp.eq.s32.totalorder %s19, 0
      %p65 = por %p63, %p64
      %s66 = ssub.s32 %s20, %s39
      %s67 = ssub.s32 %s22, %s31
      %s68 = sor.u32 %s66, %s67
      %p69 = scmp.eq.s32.totalorder %s68, 0
      %s71 = sadd.s32 %s70, 1
      %s72 = scalar_select %p69, %s70, %s71
      %p75 = pneg %p69
      %p76 = scmp.eq.s32.totalorder %s13, 3
      %p77 = por %p75, %p76
      %p78 = scmp.ne.s32.totalorder %s70, %s73
      %p79 = scmp.eq.s32.totalorder %s13, 0
      %p80 = por %p78, %p79
      %p81 = scmp.ne.s32.totalorder %s70, %s73
      %p82 = scmp.eq.s32.totalorder %s18, 3
      %p83 = por %p81, %p82
      %p84 = scmp.ne.s32.totalorder %s73, %s74
      %p85 = scmp.eq.s32.totalorder %s18, 0
      %p86 = por %p84, %p85
      %p87 = scmp.ne.s32.totalorder %s73, %s74
      %p88 = scmp.eq.s32.totalorder %s19, 3
      %p89 = por %p87, %p88
      %p91 = scmp.ne.s32.totalorder %s74, %s90
      %p92 = scmp.eq.s32.totalorder %s19, 0
      %p93 = por %p91, %p92
      %s95 = sadd.s32 %s94, 1
      %p98 = scmp.eq.s32.totalorder %s13, 3
      %p99 = scmp.ne.s32.totalorder %s94, %s96
      %p100 = scmp.eq.s32.totalorder %s13, 0
      %p101 = por %p99, %p100
      %p102 = scmp.ne.s32.totalorder %s94, %s96
      %p103 = scmp.eq.s32.totalorder %s18, 3
      %p104 = por %p102, %p103
      %p105 = scmp.ne.s32.totalorder %s96, %s97
      %p106 = scmp.eq.s32.totalorder %s18, 0
      %p107 = por %p105, %p106
      %p108 = scmp.ne.s32.totalorder %s96, %s97
      %p109 = scmp.eq.s32.totalorder %s19, 3
      %p110 = por %p108, %p109
      %p112 = scmp.ne.s32.totalorder %s97, %s111
      %p113 = scmp.eq.s32.totalorder %s19, 0
      %p114 = por %p112, %p113
      %s116 = sadd.s32 %s115, 1
      %p119 = scmp.eq.s32.totalorder %s13, 3
      %p120 = scmp.ne.s32.totalorder %s115, %s117
      %p121 = scmp.eq.s32.totalorder %s13, 0
      %p122 = por %p120, %p121
      %p123 = scmp.ne.s32.totalorder %s115, %s117
      %p124 = scmp.eq.s32.totalorder %s18, 3
      %p125 = por %p123, %p124
      %p126 = scmp.ne.s32.totalorder %s117, %s118
      %p127 = scmp.eq.s32.totalorder %s18, 0
      %p128 = por %p126, %p127
      %p129 = scmp.ne.s32.totalorder %s117, %s118
      %p130 = scmp.eq.s32.totalorder %s19, 3
      %p131 = por %p129, %p130
      %p133 = scmp.ne.s32.totalorder %s118, %s132
      %p134 = scmp.eq.s32.totalorder %s19, 0
      %p135 = por %p133, %p134
      %s137 = sadd.s32 %s136, 1
      %p140 = scmp.eq.s32.totalorder %s13, 3
      %p141 = scmp.ne.s32.totalorder %s136, %s138
      %p142 = scmp.eq.s32.totalorder %s13, 0
      %p143 = por %p141, %p142
      %p144 = scmp.ne.s32.totalorder %s136, %s138
      %p145 = scmp.eq.s32.totalorder %s18, 3
      %p146 = por %p144, %p145
      %p147 = scmp.ne.s32.totalorder %s138, %s139
      %p148 = scmp.eq.s32.totalorder %s18, 0
      %p149 = por %p147, %p148
      %p150 = scmp.ne.s32.totalorder %s138, %s139
      %p151 = scmp.eq.s32.totalorder %s19, 3
      %p152 = por %p150, %p151
      %p154 = scmp.ne.s32.totalorder %s139, %s153
      %p155 = scmp.eq.s32.totalorder %s19, 0
      %p156 = por %p154, %p155
      %s157 = ssub.s32 %s20, %s39
      %p158 = scmp.eq.s32.totalorder %s157, 0
      %s160 = sadd.s32 %s159, 1
      %s161 = scalar_select %p158, %s159, %s160
      %p164 = pneg %p158
      %p165 = scmp.eq.s32.totalorder %s13, 3
      %p166 = por %p164, %p165
      %p167 = scmp.ne.s32.totalorder %s159, %s162
      %p168 = scmp.eq.s32.totalorder %s13, 0
      %p169 = por %p167, %p168
      %p170 = scmp.ne.s32.totalorder %s159, %s162
      %p171 = scmp.eq.s32.totalorder %s18, 3
      %p172 = por %p170, %p171
      %p173 = scmp.ne.s32.totalorder %s162, %s163
      %p174 = scmp.eq.s32.totalorder %s18, 0
      %p175 = por %p173, %p174
      %p176 = scmp.ne.s32.totalorder %s162, %s163
      %p177 = scmp.eq.s32.totalorder %s19, 3
      %p178 = por %p176, %p177
      %p180 = scmp.ne.s32.totalorder %s163, %s179
      %p181 = scmp.eq.s32.totalorder %s19, 0
      %p182 = por %p180, %p181
      %p183 = scmp.le.s32.totalorder 1, %s13
      %p184 = scmp.lt.s32.totalorder %s13, 5
      %p185 = pnand %p183, %p184
      %p186 = pneg %p185
      // Predicated region
      $region9: #{tpu_custom_call.1} parent=5 // pred_check
        _
      $region10: #{tpu_custom_call.1} parent=5 // pred_check_branch
        %188 = sbr.rel (%p185) target = $region12
      $region11: #{tpu_custom_call.1} parent=5 // pred_region
        %s189 = ssub.s32 %s13, 1
        // Predicated region
        $region13: #{tpu_custom_call.1} parent=11 // pred_check
          %p190 = pneg %p107
        $region14: #{tpu_custom_call.1} parent=11 // pred_check_branch
          %192 = sbr.rel (%p190) target = $region16
        $region15: #{tpu_custom_call.1} parent=11 // pred_region
          _
        $region16: #{tpu_custom_call.1} parent=11 // pred_fallthru
          _
        // Predicated region
        $region17: #{tpu_custom_call.1} parent=11 // pred_check
          %p193 = pneg %p128
        $region18: #{tpu_custom_call.1} parent=11 // pred_check_branch
          %195 = sbr.rel (%p193) target = $region20
        $region19: #{tpu_custom_call.1} parent=11 // pred_region
          _
        $region20: #{tpu_custom_call.1} parent=11 // pred_fallthru
          _
        // Predicated region
        $region21: #{tpu_custom_call.1} parent=11 // pred_check
          %p196 = pneg %p149
        $region22: #{tpu_custom_call.1} parent=11 // pred_check_branch
          %198 = sbr.rel (%p196) target = $region24
        $region23: #{tpu_custom_call.1} parent=11 // pred_region
          %200 = vsyncadd [#allocation6], 0
          %s202 = sshll.u32 %s4, 4
          %s203 = int_to_ptr.hbm [resolvable:$true] %s202
          %s204 = sshll.u32 [#allocation5], 4
          %s205 = int_to_ptr.vmem [resolvable:$true] %s204
          %207 = dma.hbm_to_vmem [thread:$0]  %s203, 64, %s205, [#allocation6]
        $region24: #{tpu_custom_call.1} parent=11 // pred_fallthru
          _
      $region12: #{tpu_custom_call.1} parent=5 // pred_fallthru
        _
      %p208 = scmp.lt.s32.totalorder %s13, 4
      // Predicated region
      $region25: #{tpu_custom_call.1} parent=5 // pred_check
        %p209 = pneg %p208
      $region26: #{tpu_custom_call.1} parent=5 // pred_check_branch
        %211 = sbr.rel (%p209) target = $region28
      $region27: #{tpu_custom_call.1} parent=5 // pred_region
        // Predicated region
        $region29: #{tpu_custom_call.1} parent=27 // pred_check
          %p212 = pneg %p52
        $region30: #{tpu_custom_call.1} parent=27 // pred_check_branch
          %214 = sbr.rel (%p212) target = $region32
        $region31: #{tpu_custom_call.1} parent=27 // pred_region
          %s215 = smul.u32 16, %s22
          %p216 = scmp.lt.s32.totalorder %s215, 31
          %s217 = scalar_select %p216, %s215, 31
          %s218 = smul.addr %s217, 8
          %s219 = scalar_lea.vmem %s0, %s218
          %s220 = smul.u32 16, %s22
        $region32: #{tpu_custom_call.1} parent=27 // pred_fallthru
          _
        // Predicated region
        $region33: #{tpu_custom_call.1} parent=27 // pred_check
          %p221 = pneg %p80
        $region34: #{tpu_custom_call.1} parent=27 // pred_check_branch
          %223 = sbr.rel (%p221) target = $region36
        $region35: #{tpu_custom_call.1} parent=27 // pred_region
          %s224 = sand.u32 %s70, 1
          %s225 = sand.u32 %s70, 1
          %s226 = smul.addr %s225, 16
          %s227 = scalar_lea.vmem [#allocation4], %s226
          %s228 = smul.u32 2, %s20
          %s229 = smul.addr %s228, 2
          %s230 = sadd.s32 %s22, %s229
          %s231 = smul.addr %s230, 8
          %s232 = scalar_lea.vmem %s1, %s231
          // Predicated region
          $region37: #{tpu_custom_call.1} parent=35 // pred_check
            _
          $region38: #{tpu_custom_call.1} parent=35 // pred_check_branch
            %234 = sbr.rel (0) target = $region40
          $region39: #{tpu_custom_call.1} parent=35 // pred_region
            // Predicated region
            $region41: #{tpu_custom_call.1} parent=39 // pred_check
              _
            $region42: #{tpu_custom_call.1} parent=39 // pred_check_branch
              %236 = sbr.rel (0) target = $region44
            $region43: #{tpu_custom_call.1} parent=39 // pred_region
              // Predicated region
              $region56: #{tpu_custom_call.1} parent=43 // pred_check
                _
              $region57: #{tpu_custom_call.1} parent=43 // pred_check_branch
                %254 = sbr.rel (0) target = $region59
              $region58: #{tpu_custom_call.1} parent=43 // pred_region
                loop: start=0, step=1, limit=1
                $region60: #{tpu_custom_call.1} parent=58 // loop_pre_header
                  _
                $region61: #{tpu_custom_call.1} parent=58 // loop_header
                  %s256 = sphi 0, %s260
                  %p257 = scmp.ge.s32.totalorder %s256, 1
                  %s261 = sphi %s232, %s232
                  %s262 = sphi %s227, %s227
                $region62: #{tpu_custom_call.1} parent=58 // loop_header_branch
                  %259 = sbr.rel (%p257) target = $region66
                $region63: #{tpu_custom_call.1} parent=58 // loop_body
                  %v263 = vld [vmem:[%s261] sm:$0xff]
                  %264 = vst [vmem:[%s262] sm:$0xff] %v263
                  %v265 = vld [vmem:[%s261 + $0x10] sm:$0xff]
                  %266 = vst [vmem:[%s262 + $0x8] sm:$0xff] %v265
                $region64: #{tpu_custom_call.1} parent=58 // loop_footer
                  %s260 = sadd.s32 1, %s256
                $region65: #{tpu_custom_call.1} parent=58 // loop_footer_branch
                  %255 = sbr.rel target = $region61
                $region66: #{tpu_custom_call.1} parent=58 // loop_exit
                  _
              $region59: #{tpu_custom_call.1} parent=43 // pred_fallthru
                _
              // Predicated region
              $region67: #{tpu_custom_call.1} parent=43 // pred_check
                _
              $region68: #{tpu_custom_call.1} parent=43 // pred_check_branch
                %268 = sbr.rel target = $region70
              $region69: #{tpu_custom_call.1} parent=43 // pred_region
                _
              $region70: #{tpu_custom_call.1} parent=43 // pred_fallthru
                _
            $region44: #{tpu_custom_call.1} parent=39 // pred_fallthru
              _
            // Predicated region
            $region45: #{tpu_custom_call.1} parent=39 // pred_check
              _
            $region46: #{tpu_custom_call.1} parent=39 // pred_check_branch
              %238 = sbr.rel target = $region48
            $region47: #{tpu_custom_call.1} parent=39 // pred_region
              %s240 = ssub.s32 256, 1
              loop: start=0, step=1, limit=1
              $region49: #{tpu_custom_call.1} parent=47 // loop_pre_header
                _
              $region50: #{tpu_custom_call.1} parent=47 // loop_header
                %s242 = sphi 0, %s246
                %p243 = scmp.ge.s32.totalorder %s242, 1
                %s247 = sphi %s232, %s232
                %s248 = sphi %s227, %s227
              $region51: #{tpu_custom_call.1} parent=47 // loop_header_branch
                %245 = sbr.rel (%p243) target = $region55
              $region52: #{tpu_custom_call.1} parent=47 // loop_body
                %v249 = vld [vmem:[%s247] sm:%s240]
                %250 = vst [vmem:[%s248] sm:%s240] %v249
                %v251 = vld [vmem:[%s247 + $0x10] sm:%s240]
                %252 = vst [vmem:[%s248 + $0x8] sm:%s240] %v251
              $region53: #{tpu_custom_call.1} parent=47 // loop_footer
                %s246 = sadd.s32 1, %s242
              $region54: #{tpu_custom_call.1} parent=47 // loop_footer_branch
                %241 = sbr.rel target = $region50
              $region55: #{tpu_custom_call.1} parent=47 // loop_exit
                _
            $region48: #{tpu_custom_call.1} parent=39 // pred_fallthru
              _
          $region40: #{tpu_custom_call.1} parent=35 // pred_fallthru
            _
          %269 = vnop
        $region36: #{tpu_custom_call.1} parent=27 // pred_fallthru
          _
      $region28: #{tpu_custom_call.1} parent=5 // pred_fallthru
        _
      %p270 = scmp.le.s32.totalorder 1, %s13
      %p271 = scmp.lt.s32.totalorder %s13, 5
      %p272 = pnand %p270, %p271
      %p273 = pneg %p272
      // Predicated region
      $region71: #{tpu_custom_call.1} parent=5 // pred_check
        _
      $region72: #{tpu_custom_call.1} parent=5 // pred_check_branch
        %275 = sbr.rel (%p272) target = $region74
      $region73: #{tpu_custom_call.1} parent=5 // pred_region
        %s276 = ssub.s32 %s13, 1
        %s277 = sand.u32 %s73, 1
        %s278 = sand.u32 %s73, 1
        %s279 = smul.addr %s278, 16
        %s280 = scalar_lea.vmem [#allocation4], %s279
        // Predicated region
        $region75: #{tpu_custom_call.1} parent=73 // pred_check
          %p281 = pneg %p86
        $region76: #{tpu_custom_call.1} parent=73 // pred_check_branch
          %283 = sbr.rel (%p281) target = $region78
        $region77: #{tpu_custom_call.1} parent=73 // pred_region
          _
        $region78: #{tpu_custom_call.1} parent=73 // pred_fallthru
          _
        // Predicated region
        $region79: #{tpu_custom_call.1} parent=73 // pred_check
          %p284 = pneg %p149
        $region80: #{tpu_custom_call.1} parent=73 // pred_check_branch
          %286 = sbr.rel (%p284) target = $region82
        $region81: #{tpu_custom_call.1} parent=73 // pred_region
          %288 = dma.done [#allocation6], 64
        $region82: #{tpu_custom_call.1} parent=73 // pred_fallthru
          _
        %s289 = smul.u32 16, %s25
        %p290 = scmp.lt.s32.totalorder %s289, 31
        %s291 = scalar_select %p290, %s289, 31
        %s292 = smul.addr %s291, 8
        %s293 = scalar_lea.vmem %s0, %s292
        %p294 = pneg %p58
        %p295 = pneg %p55
        %s296 = sand.u32 %s73, 1
        %s297 = sand.u32 %s73, 1
        %s298 = smul.addr %s297, 16
        %s299 = scalar_lea.vmem [#allocation4], %s298
        %p300 = pneg %p86
        %p301 = pneg %p83
        %p302 = pneg %p107
        %p303 = pneg %p104
        %p304 = pneg %p128
        %p305 = pneg %p125
        %p306 = pneg %p149
        %p307 = pneg %p146
        %p308 = pneg %p175
        %p309 = pneg %p172
        %s310 = smul.u32 16, %s25
        %p311 = scmp.lt.s32.totalorder %s310, 31
        %s312 = scalar_select %p311, %s310, 31
        %s313 = smul.addr %s312, 8
        %s314 = scalar_lea.vmem %s0, %s313
        %s315 = smul.u32 16, %s25
        %s316 = smul.u32 2, %s23
        %s317 = smul.u32 2, %s23
        %v318 = vld [vmem:[%s314] sm:$0xff]
        %v319 = vld [vmem:[%s314 + $0x8] sm:$0xff]
        %v320 = vld [vmem:[%s314 + $0x10] sm:$0xff]
        %v321 = vld [vmem:[%s314 + $0x18] sm:$0xff]
        %v322 = vld [vmem:[%s314 + $0x20] sm:$0xff]
        %v323 = vld [vmem:[%s314 + $0x28] sm:$0xff]
        %v324 = vld [vmem:[%s314 + $0x30] sm:$0xff]
        %v325 = vld [vmem:[%s314 + $0x38] sm:$0xff]
        %v326 = vld [vmem:[%s314 + $0x40] sm:$0xff]
        %v327 = vld [vmem:[%s314 + $0x48] sm:$0xff]
        %v328 = vld [vmem:[%s314 + $0x50] sm:$0xff]
        %v329 = vld [vmem:[%s314 + $0x58] sm:$0xff]
        %v330 = vld [vmem:[%s314 + $0x60] sm:$0xff]
        %v331 = vld [vmem:[%s314 + $0x68] sm:$0xff]
        %v332 = vld [vmem:[%s314 + $0x70] sm:$0xff]
        %v333 = vld [vmem:[%s314 + $0x78] sm:$0xff]
        %v334 = vld [vmem:[%s280] sm:$0xff]
        %v335 = vld [vmem:[%s280 + $0x8] sm:$0xff]
        %p336 = scmp.eq.s32.totalorder %s24, 0
        %p337 = scmp.eq.s32.totalorder %s25, 0
        %p338 = pnand %p336, %p337
        %p339 = pneg %p338
        // Predicated region
        $region83: #{tpu_custom_call.1} parent=73 // pred_check
          _
        $region84: #{tpu_custom_call.1} parent=73 // pred_check_branch
          %341 = sbr.rel (%p338) target = $region86
        $region85: #{tpu_custom_call.1} parent=73 // pred_region
          %vm342 = vcmask 31744
          %343 = vst.msk [vmem:[#allocation2] sm:$0xff] %vm342, -1e+30
          %344 = vst.msk [vmem:[#allocation2 + $0x8] sm:$0xff] %vm342, -1e+30
        $region86: #{tpu_custom_call.1} parent=73 // pred_fallthru
          _
        // Predicated region
        $region87: #{tpu_custom_call.1} parent=73 // pred_check
          %p345 = pneg %p336
        $region88: #{tpu_custom_call.1} parent=73 // pred_check_branch
          %347 = sbr.rel (%p345) target = $region90
        $region89: #{tpu_custom_call.1} parent=73 // pred_region
          %v348 = vld [vmem:[#allocation5] sm:$0xf]
          %349 = vmatpush.xpose.msra.mxu0 %v333
          %350 = vmatpush.xpose.msra.mxu0 %v332
          %351 = vmatpush.xpose.msra.mxu0 %v331
          %352 = vmatpush.xpose.msra.mxu0 %v330
          %353 = vmatpush.xpose.msra.mxu0 %v329
          %354 = vmatpush.xpose.msra.mxu0 %v328
          %355 = vmatpush.xpose.msra.mxu0 %v327
          %356 = vmatpush.xpose.msra.mxu0 %v326
          %357 = vmatpush.xpose.msra.mxu0 %v325
          %358 = vmatpush.xpose.msra.mxu0 %v324
          %359 = vmatpush.xpose.msra.mxu0 %v323
          %360 = vmatpush.xpose.msra.mxu0 %v322
          %361 = vmatpush.xpose.msra.mxu0 %v321
          %362 = vmatpush.xpose.msra.mxu0 %v320
          %363 = vmatpush.xpose.msra.mxu0 %v319
          %364 = vmatpush.xpose.msra.mxu0 %v318
          %365 = vmatmul.f32.gmra.mxu0 %v348
          %v366 = vpop.f32.mrf.mxu0
          %v367 = vadd.f32 0.0, %v366
          %368 = vdwg.mxu0
          %vm369 = vcmp.ge.f32.partialorder %v367, 0.0
          %v370 = vmul.f32 %v367, 0.01
          %v371 = vsel %vm369, %v367, %v370
          %vm372 = vcmp.gt.f32.partialorder %v334, 0.5
          %vm373 = vcmp.gt.f32.partialorder %v335, 0.5
          %v374 = vperm.slane %v371, 0
          %v375 = vsel %vm372, %v374, -1e+30
          %v376 = vsel %vm373, %v374, -1e+30
          %377 = vmax.xlane.f32.xlu0 %v375
          %v378 = vpop.xlane.xlu0 %377
          %379 = vmax.xlane.f32.xlu0 %v376
          %v380 = vpop.xlane.xlu0 %379
          %v381 = vperm.slane %v371, 1
          %v382 = vsel %vm372, %v381, -1e+30
          %v383 = vsel %vm373, %v381, -1e+30
          %384 = vmax.xlane.f32.xlu0 %v382
          %v385 = vpop.xlane.xlu0 %384
          %386 = vmax.xlane.f32.xlu0 %v383
          %v387 = vpop.xlane.xlu0 %386
          %v388 = vperm.slane %v371, 2
          %v389 = vsel %vm372, %v388, -1e+30
          %v390 = vsel %vm373, %v388, -1e+30
          %391 = vmax.xlane.f32.xlu0 %v389
          %v392 = vpop.xlane.xlu0 %391
          %393 = vmax.xlane.f32.xlu0 %v390
          %v394 = vpop.xlane.xlu0 %393
          %v395 = vperm.slane %v371, 3
          %v396 = vsel %vm372, %v395, -1e+30
          %v397 = vsel %vm373, %v395, -1e+30
          %398 = vmax.xlane.f32.xlu0 %v396
          %v399 = vpop.xlane.xlu0 %398
          %400 = vmax.xlane.f32.xlu0 %v397
          %v401 = vpop.xlane.xlu0 %400
          %vm402 = vcmask 7168
          %v403 = vsel %vm402, %v378, %v385
          %v404 = vsel %vm402, %v380, %v387
          %vm405 = vcmask 15360
          %v406 = vsel %vm405, %v403, %v392
          %v407 = vsel %vm405, %v404, %v394
          %vm408 = vcmask 23552
          %v409 = vsel %vm408, %v406, %v399
          %v410 = vsel %vm408, %v407, %v401
          %v411 = vld [vmem:[#allocation2] sm:$0xff]
          %v412 = vld [vmem:[#allocation2 + $0x8] sm:$0xff]
          %v413 = vmax.f32 %v411, %v409
          %v414 = vmax.f32 %v412, %v410
          %vm415 = vcmask 31744
          %416 = vst.msk [vmem:[#allocation2] sm:$0xff] %vm415, %v413
          %417 = vst.msk [vmem:[#allocation2 + $0x8] sm:$0xff] %vm415, %v414
        $region90: #{tpu_custom_call.1} parent=73 // pred_fallthru
          _
        %p418 = scmp.eq.s32.totalorder %s24, 1
        %p419 = pnand %p418, %p337
        %p420 = pneg %p419
        // Predicated region
        $region91: #{tpu_custom_call.1} parent=73 // pred_check
          _
        $region92: #{tpu_custom_call.1} parent=73 // pred_check_branch
          %422 = sbr.rel (%p419) target = $region94
        $region93: #{tpu_custom_call.1} parent=73 // pred_region
          %vm423 = vcmask 31744
          %424 = vst.msk [vmem:[#allocation3] sm:$0xff] %vm423, 0.0
          %425 = vst.msk [vmem:[#allocation3 + $0x8] sm:$0xff] %vm423, 0.0
          %426 = vst [vmem:[#allocation8] sm:$0xff] 0.0
          %427 = vst [vmem:[#allocation8 + $0x8] sm:$0xff] 0.0
        $region94: #{tpu_custom_call.1} parent=73 // pred_fallthru
          _
        // Predicated region
        $region95: #{tpu_custom_call.1} parent=73 // pred_check
          %p428 = pneg %p418
        $region96: #{tpu_custom_call.1} parent=73 // pred_check_branch
          %430 = sbr.rel (%p428) target = $region98
        $region97: #{tpu_custom_call.1} parent=73 // pred_region
          %v431 = vld [vmem:[%s2] sm:$0xff]
          %v432 = vld [vmem:[%s2 + $0x8] sm:$0xff]
          %v433 = vld [vmem:[%s2 + $0x10] sm:$0xff]
          %v434 = vld [vmem:[%s2 + $0x18] sm:$0xff]
          %v435 = vld [vmem:[%s2 + $0x20] sm:$0xff]
          %v436 = vld [vmem:[%s2 + $0x28] sm:$0xff]
          %v437 = vld [vmem:[%s2 + $0x30] sm:$0xff]
          %v438 = vld [vmem:[%s2 + $0x38] sm:$0xff]
          %v439 = vld [vmem:[%s2 + $0x40] sm:$0xff]
          %v440 = vld [vmem:[%s2 + $0x48] sm:$0xff]
          %v441 = vld [vmem:[%s2 + $0x50] sm:$0xff]
          %v442 = vld [vmem:[%s2 + $0x58] sm:$0xff]
          %v443 = vld [vmem:[%s2 + $0x60] sm:$0xff]
          %v444 = vld [vmem:[%s2 + $0x68] sm:$0xff]
          %v445 = vld [vmem:[%s2 + $0x70] sm:$0xff]
          %v446 = vld [vmem:[%s2 + $0x78] sm:$0xff]
          %447 = vmatpush.msra.mxu0 %v446
          %448 = vmatpush.msra.mxu0 %v445
          %449 = vmatpush.msra.mxu0 %v444
          %450 = vmatpush.msra.mxu0 %v443
          %451 = vmatpush.msra.mxu0 %v442
          %452 = vmatpush.msra.mxu0 %v441
          %453 = vmatpush.msra.mxu0 %v440
          %454 = vmatpush.msra.mxu0 %v439
          %455 = vmatpush.msra.mxu0 %v438
          %456 = vmatpush.msra.mxu0 %v437
          %457 = vmatpush.msra.mxu0 %v436
          %458 = vmatpush.msra.mxu0 %v435
          %459 = vmatpush.msra.mxu0 %v434
          %460 = vmatpush.msra.mxu0 %v433
          %461 = vmatpush.msra.mxu0 %v432
          %462 = vmatpush.msra.mxu0 %v431
          %463 = vmatmul.f32.gmra.mxu0 %v318
          %v464 = vpop.f32.mrf.mxu0
          %v465 = vadd.f32 0.0, %v464
          %466 = vmatmul.f32.gmra.mxu0 %v319
          %v467 = vpop.f32.mrf.mxu0
          %v468 = vadd.f32 0.0, %v467
          %469 = vmatmul.f32.gmra.mxu0 %v320
          %v470 = vpop.f32.mrf.mxu0
          %v471 = vadd.f32 0.0, %v470
          %472 = vmatmul.f32.gmra.mxu0 %v321
          %v473 = vpop.f32.mrf.mxu0
          %v474 = vadd.f32 0.0, %v473
          %475 = vmatmul.f32.gmra.mxu0 %v322
          %v476 = vpop.f32.mrf.mxu0
          %v477 = vadd.f32 0.0, %v476
          %478 = vmatmul.f32.gmra.mxu0 %v323
          %v479 = vpop.f32.mrf.mxu0
          %v480 = vadd.f32 0.0, %v479
          %481 = vmatmul.f32.gmra.mxu0 %v324
          %v482 = vpop.f32.mrf.mxu0
          %v483 = vadd.f32 0.0, %v482
          %484 = vmatmul.f32.gmra.mxu0 %v325
          %v485 = vpop.f32.mrf.mxu0
          %v486 = vadd.f32 0.0, %v485
          %487 = vmatmul.f32.gmra.mxu0 %v326
          %v488 = vpop.f32.mrf.mxu0
          %v489 = vadd.f32 0.0, %v488
          %490 = vmatmul.f32.gmra.mxu0 %v327
          %v491 = vpop.f32.mrf.mxu0
          %v492 = vadd.f32 0.0, %v491
          %493 = vmatmul.f32.gmra.mxu0 %v328
          %v494 = vpop.f32.mrf.mxu0
          %v495 = vadd.f32 0.0, %v494
          %496 = vmatmul.f32.gmra.mxu0 %v329
          %v497 = vpop.f32.mrf.mxu0
          %v498 = vadd.f32 0.0, %v497
          %499 = vmatmul.f32.gmra.mxu0 %v330
          %v500 = vpop.f32.mrf.mxu0
          %v501 = vadd.f32 0.0, %v500
          %502 = vmatmul.f32.gmra.mxu0 %v331
          %v503 = vpop.f32.mrf.mxu0
          %v504 = vadd.f32 0.0, %v503
          %505 = vmatmul.f32.gmra.mxu0 %v332
          %v506 = vpop.f32.mrf.mxu0
          %v507 = vadd.f32 0.0, %v506
          %508 = vmatmul.f32.gmra.mxu0 %v333
          %v509 = vpop.f32.mrf.mxu0
          %v510 = vadd.f32 0.0, %v509
          %511 = vdwg.mxu0
          %v512 = vld [vmem:[%s3] sm:$0xff]
          %v513 = vld [vmem:[%s3 + $0x8] sm:$0xff]
          %v514 = vld [vmem:[%s3 + $0x10] sm:$0xff]
          %v515 = vld [vmem:[%s3 + $0x18] sm:$0xff]
          %v516 = vld [vmem:[%s3 + $0x20] sm:$0xff]
          %v517 = vld [vmem:[%s3 + $0x28] sm:$0xff]
          %v518 = vld [vmem:[%s3 + $0x30] sm:$0xff]
          %v519 = vld [vmem:[%s3 + $0x38] sm:$0xff]
          %v520 = vld [vmem:[%s3 + $0x40] sm:$0xff]
          %v521 = vld [vmem:[%s3 + $0x48] sm:$0xff]
          %v522 = vld [vmem:[%s3 + $0x50] sm:$0xff]
          %v523 = vld [vmem:[%s3 + $0x58] sm:$0xff]
          %v524 = vld [vmem:[%s3 + $0x60] sm:$0xff]
          %v525 = vld [vmem:[%s3 + $0x68] sm:$0xff]
          %v526 = vld [vmem:[%s3 + $0x70] sm:$0xff]
          %v527 = vld [vmem:[%s3 + $0x78] sm:$0xff]
          %528 = vmatpush.msra.mxu0 %v527
          %529 = vmatpush.msra.mxu0 %v526
          %530 = vmatpush.msra.mxu0 %v525
          %531 = vmatpush.msra.mxu0 %v524
          %532 = vmatpush.msra.mxu0 %v523
          %533 = vmatpush.msra.mxu0 %v522
          %534 = vmatpush.msra.mxu0 %v521
          %535 = vmatpush.msra.mxu0 %v520
          %536 = vmatpush.msra.mxu0 %v519
          %537 = vmatpush.msra.mxu0 %v518
          %538 = vmatpush.msra.mxu0 %v517
          %539 = vmatpush.msra.mxu0 %v516
          %540 = vmatpush.msra.mxu0 %v515
          %541 = vmatpush.msra.mxu0 %v514
          %542 = vmatpush.msra.mxu0 %v513
          %543 = vmatpush.msra.mxu0 %v512
          %544 = vmatmul.f32.gmra.mxu0 %v318
          %v545 = vpop.f32.mrf.mxu0
          %v546 = vadd.f32 0.0, %v545
          %547 = vmatmul.f32.gmra.mxu0 %v319
          %v548 = vpop.f32.mrf.mxu0
          %v549 = vadd.f32 0.0, %v548
          %550 = vmatmul.f32.gmra.mxu0 %v320
          %v551 = vpop.f32.mrf.mxu0
          %v552 = vadd.f32 0.0, %v551
          %553 = vmatmul.f32.gmra.mxu0 %v321
          %v554 = vpop.f32.mrf.mxu0
          %v555 = vadd.f32 0.0, %v554
          %556 = vmatmul.f32.gmra.mxu0 %v322
          %v557 = vpop.f32.mrf.mxu0
          %v558 = vadd.f32 0.0, %v557
          %559 = vmatmul.f32.gmra.mxu0 %v323
          %v560 = vpop.f32.mrf.mxu0
          %v561 = vadd.f32 0.0, %v560
          %562 = vmatmul.f32.gmra.mxu0 %v324
          %v563 = vpop.f32.mrf.mxu0
          %v564 = vadd.f32 0.0, %v563
          %565 = vmatmul.f32.gmra.mxu0 %v325
          %v566 = vpop.f32.mrf.mxu0
          %v567 = vadd.f32 0.0, %v566
          %568 = vmatmul.f32.gmra.mxu0 %v326
          %v569 = vpop.f32.mrf.mxu0
          %v570 = vadd.f32 0.0, %v569
          %571 = vmatmul.f32.gmra.mxu0 %v327
          %v572 = vpop.f32.mrf.mxu0
          %v573 = vadd.f32 0.0, %v572
          %574 = vmatmul.f32.gmra.mxu0 %v328
          %v575 = vpop.f32.mrf.mxu0
          %v576 = vadd.f32 0.0, %v575
          %577 = vmatmul.f32.gmra.mxu0 %v329
          %v578 = vpop.f32.mrf.mxu0
          %v579 = vadd.f32 0.0, %v578
          %580 = vmatmul.f32.gmra.mxu0 %v330
          %v581 = vpop.f32.mrf.mxu0
          %v582 = vadd.f32 0.0, %v581
          %583 = vmatmul.f32.gmra.mxu0 %v331
          %v584 = vpop.f32.mrf.mxu0
          %v585 = vadd.f32 0.0, %v584
          %586 = vmatmul.f32.gmra.mxu0 %v332
          %v587 = vpop.f32.mrf.mxu0
          %v588 = vadd.f32 0.0, %v587
          %589 = vmatmul.f32.gmra.mxu0 %v333
          %v590 = vpop.f32.mrf.mxu0
          %v591 = vadd.f32 0.0, %v590
          %592 = vdwg.mxu0
          %vm593 = vcmp.ge.f32.partialorder %v546, 0.0
          %vm594 = vcmp.ge.f32.partialorder %v549, 0.0
          %vm595 = vcmp.ge.f32.partialorder %v552, 0.0
          %vm596 = vcmp.ge.f32.partialorder %v555, 0.0
          %vm597 = vcmp.ge.f32.partialorder %v558, 0.0
          %vm598 = vcmp.ge.f32.partialorder %v561, 0.0
          %vm599 = vcmp.ge.f32.partialorder %v564, 0.0
          %vm600 = vcmp.ge.f32.partialorder %v567, 0.0
          %vm601 = vcmp.ge.f32.partialorder %v570, 0.0
          %vm602 = vcmp.ge.f32.partialorder %v573, 0.0
          %vm603 = vcmp.ge.f32.partialorder %v576, 0.0
          %vm604 = vcmp.ge.f32.partialorder %v579, 0.0
          %vm605 = vcmp.ge.f32.partialorder %v582, 0.0
          %vm606 = vcmp.ge.f32.partialorder %v585, 0.0
          %vm607 = vcmp.ge.f32.partialorder %v588, 0.0
          %vm608 = vcmp.ge.f32.partialorder %v591, 0.0
          %v609 = vmul.f32 %v546, 0.01
          %v610 = vmul.f32 %v549, 0.01
          %v611 = vmul.f32 %v552, 0.01
          %v612 = vmul.f32 %v555, 0.01
          %v613 = vmul.f32 %v558, 0.01
          %v614 = vmul.f32 %v561, 0.01
          %v615 = vmul.f32 %v564, 0.01
          %v616 = vmul.f32 %v567, 0.01
          %v617 = vmul.f32 %v570, 0.01
          %v618 = vmul.f32 %v573, 0.01
          %v619 = vmul.f32 %v576, 0.01
          %v620 = vmul.f32 %v579, 0.01
          %v621 = vmul.f32 %v582, 0.01
          %v622 = vmul.f32 %v585, 0.01
          %v623 = vmul.f32 %v588, 0.01
          %v624 = vmul.f32 %v591, 0.01
          %v625 = vsel %vm593, %v546, %v609
          %v626 = vsel %vm594, %v549, %v610
          %v627 = vsel %vm595, %v552, %v611
          %v628 = vsel %vm596, %v555, %v612
          %v629 = vsel %vm597, %v558, %v613
          %v630 = vsel %vm598, %v561, %v614
          %v631 = vsel %vm599, %v564, %v615
          %v632 = vsel %vm600, %v567, %v616
          %v633 = vsel %vm601, %v570, %v617
          %v634 = vsel %vm602, %v573, %v618
          %v635 = vsel %vm603, %v576, %v619
          %v636 = vsel %vm604, %v579, %v620
          %v637 = vsel %vm605, %v582, %v621
          %v638 = vsel %vm606, %v585, %v622
          %v639 = vsel %vm607, %v588, %v623
          %v640 = vsel %vm608, %v591, %v624
          %v641 = vld [vmem:[#allocation2] sm:$0xff]
          %v642 = vld [vmem:[#allocation2 + $0x8] sm:$0xff]
          %643 = vxpose.xlu0.b32.start [1/16] %v334, 128
          %644 = vxpose.xlu0.b32.cont [2/16] %v335, 128
          %645 = vxpose.xlu0.b32.cont [3/16] 0.0, 128
          %646 = vxpose.xlu0.b32.cont [4/16] 0.0, 128
          %647 = vxpose.xlu0.b32.cont [5/16] 0.0, 128
          %648 = vxpose.xlu0.b32.cont [6/16] 0.0, 128
          %649 = vxpose.xlu0.b32.cont [7/16] 0.0, 128
          %650 = vxpose.xlu0.b32.cont [8/16] 0.0, 128
          %651 = vxpose.xlu0.b32.cont [9/16] 0.0, 128
          %652 = vxpose.xlu0.b32.cont [10/16] 0.0, 128
          %653 = vxpose.xlu0.b32.cont [11/16] 0.0, 128
          %654 = vxpose.xlu0.b32.cont [12/16] 0.0, 128
          %655 = vxpose.xlu0.b32.cont [13/16] 0.0, 128
          %656 = vxpose.xlu0.b32.cont [14/16] 0.0, 128
          %657 = vxpose.xlu0.b32.cont [15/16] 0.0, 128
          %658 = vxpose.xlu0.b32.end [16/16] 0.0, 128
          %v659 = vpop.trf.xlu0
          %v660 = vpop.trf.xlu0
          %v661 = vpop.trf.xlu0
          %v662 = vpop.trf.xlu0
          %v663 = vpop.trf.xlu0
          %v664 = vpop.trf.xlu0
          %v665 = vpop.trf.xlu0
          %v666 = vpop.trf.xlu0
          %v667 = vpop.trf.xlu0
          %v668 = vpop.trf.xlu0
          %v669 = vpop.trf.xlu0
          %v670 = vpop.trf.xlu0
          %v671 = vpop.trf.xlu0
          %v672 = vpop.trf.xlu0
          %v673 = vpop.trf.xlu0
          %v674 = vpop.trf.xlu0
          %vm675 = vcmask 130048
          %v677 = vsel %vm675, %v659, 0
          %v680 = vsel %vm675, %v660, 0
          %v683 = vsel %vm675, %v661, 0
          %v686 = vsel %vm675, %v662, 0
          %v689 = vsel %vm675, %v663, 0
          %v692 = vsel %vm675, %v664, 0
          %v695 = vsel %vm675, %v665, 0
          %v698 = vsel %vm675, %v666, 0
          %v701 = vsel %vm675, %v667, 0
          %v704 = vsel %vm675, %v668, 0
          %v707 = vsel %vm675, %v669, 0
          %v710 = vsel %vm675, %v670, 0
          %v713 = vsel %vm675, %v671, 0
          %v716 = vsel %vm675, %v672, 0
          %v719 = vsel %vm675, %v673, 0
          %v722 = vsel %vm675, %v674, 0
          %724 = vmatpush.msra.mxu0 0.0
          %725 = vmatpush.msra.mxu0 0.0
          %726 = vmatpush.msra.mxu0 0.0
          %727 = vmatpush.msra.mxu0 0.0
          %728 = vmatpush.msra.mxu0 0.0
          %729 = vmatpush.msra.mxu0 0.0
          %730 = vmatpush.msra.mxu0 0.0
          %731 = vmatpush.msra.mxu0 0.0
          %732 = vmatpush.msra.mxu0 0.0
          %733 = vmatpush.msra.mxu0 0.0
          %734 = vmatpush.msra.mxu0 0.0
          %735 = vmatpush.msra.mxu0 0.0
          %736 = vmatpush.msra.mxu0 0.0
          %737 = vmatpush.msra.mxu0 0.0
          %738 = vmatpush.msra.mxu0 %v642
          %739 = vmatpush.msra.mxu0 %v641
          %740 = vmatmul.f32.gmra.mxu0 %v677
          %v741 = vpop.f32.mrf.mxu0
          %v742 = vadd.f32 0.0, %v741
          %743 = vmatmul.f32.gmra.mxu0 %v680
          %v744 = vpop.f32.mrf.mxu0
          %v745 = vadd.f32 0.0, %v744
          %746 = vmatmul.f32.gmra.mxu0 %v683
          %v747 = vpop.f32.mrf.mxu0
          %v748 = vadd.f32 0.0, %v747
          %749 = vmatmul.f32.gmra.mxu0 %v686
          %v750 = vpop.f32.mrf.mxu0
          %v751 = vadd.f32 0.0, %v750
          %752 = vmatmul.f32.gmra.mxu0 %v689
          %v753 = vpop.f32.mrf.mxu0
          %v754 = vadd.f32 0.0, %v753
          %755 = vmatmul.f32.gmra.mxu0 %v692
          %v756 = vpop.f32.mrf.mxu0
          %v757 = vadd.f32 0.0, %v756
          %758 = vmatmul.f32.gmra.mxu0 %v695
          %v759 = vpop.f32.mrf.mxu0
          %v760 = vadd.f32 0.0, %v759
          %761 = vmatmul.f32.gmra.mxu0 %v698
          %v762 = vpop.f32.mrf.mxu0
          %v763 = vadd.f32 0.0, %v762
          %764 = vmatmul.f32.gmra.mxu0 %v701
          %v765 = vpop.f32.mrf.mxu0
          %v766 = vadd.f32 0.0, %v765
          %767 = vmatmul.f32.gmra.mxu0 %v704
          %v768 = vpop.f32.mrf.mxu0
          %v769 = vadd.f32 0.0, %v768
          %770 = vmatmul.f32.gmra.mxu0 %v707
          %v771 = vpop.f32.mrf.mxu0
          %v772 = vadd.f32 0.0, %v771
          %773 = vmatmul.f32.gmra.mxu0 %v710
          %v774 = vpop.f32.mrf.mxu0
          %v775 = vadd.f32 0.0, %v774
          %776 = vmatmul.f32.gmra.mxu0 %v713
          %v777 = vpop.f32.mrf.mxu0
          %v778 = vadd.f32 0.0, %v777
          %779 = vmatmul.f32.gmra.mxu0 %v716
          %v780 = vpop.f32.mrf.mxu0
          %v781 = vadd.f32 0.0, %v780
          %782 = vmatmul.f32.gmra.mxu0 %v719
          %v783 = vpop.f32.mrf.mxu0
          %v784 = vadd.f32 0.0, %v783
          %785 = vmatmul.f32.gmra.mxu0 %v722
          %v786 = vpop.f32.mrf.mxu0
          %v787 = vadd.f32 0.0, %v786
          %788 = vdwg.mxu0
          %v789 = vsub.f32 %v625, %v742
          %v790 = vsub.f32 %v626, %v745
          %v791 = vsub.f32 %v627, %v748
          %v792 = vsub.f32 %v628, %v751
          %v793 = vsub.f32 %v629, %v754
          %v794 = vsub.f32 %v630, %v757
          %v795 = vsub.f32 %v631, %v760
          %v796 = vsub.f32 %v632, %v763
          %v797 = vsub.f32 %v633, %v766
          %v798 = vsub.f32 %v634, %v769
          %v799 = vsub.f32 %v635, %v772
          %v800 = vsub.f32 %v636, %v775
          %v801 = vsub.f32 %v637, %v778
          %v802 = vsub.f32 %v638, %v781
          %v803 = vsub.f32 %v639, %v784
          %v804 = vsub.f32 %v640, %v787
          %v805 = vmin.f32 %v789, 0.0
          %v806 = vmin.f32 %v790, 0.0
          %v807 = vmin.f32 %v791, 0.0
          %v808 = vmin.f32 %v792, 0.0
          %v809 = vmin.f32 %v793, 0.0
          %v810 = vmin.f32 %v794, 0.0
          %v811 = vmin.f32 %v795, 0.0
          %v812 = vmin.f32 %v796, 0.0
          %v813 = vmin.f32 %v797, 0.0
          %v814 = vmin.f32 %v798, 0.0
          %v815 = vmin.f32 %v799, 0.0
          %v816 = vmin.f32 %v800, 0.0
          %v817 = vmin.f32 %v801, 0.0
          %v818 = vmin.f32 %v802, 0.0
          %v819 = vmin.f32 %v803, 0.0
          %v820 = vmin.f32 %v804, 0.0
          %v821 = vmul.f32 %v805, 1.442695
          %v822 = vpow.pop %v821
          %v823 = vmul.f32 %v806, 1.442695
          %v824 = vpow.pop %v823
          %v825 = vmul.f32 %v807, 1.442695
          %v826 = vpow.pop %v825
          %v827 = vmul.f32 %v808, 1.442695
          %v828 = vpow.pop %v827
          %v829 = vmul.f32 %v809, 1.442695
          %v830 = vpow.pop %v829
          %v831 = vmul.f32 %v810, 1.442695
          %v832 = vpow.pop %v831
          %v833 = vmul.f32 %v811, 1.442695
          %v834 = vpow.pop %v833
          %v835 = vmul.f32 %v812, 1.442695
          %v836 = vpow.pop %v835
          %v837 = vmul.f32 %v813, 1.442695
          %v838 = vpow.pop %v837
          %v839 = vmul.f32 %v814, 1.442695
          %v840 = vpow.pop %v839
          %v841 = vmul.f32 %v815, 1.442695
          %v842 = vpow.pop %v841
          %v843 = vmul.f32 %v816, 1.442695
          %v844 = vpow.pop %v843
          %v845 = vmul.f32 %v817, 1.442695
          %v846 = vpow.pop %v845
          %v847 = vmul.f32 %v818, 1.442695
          %v848 = vpow.pop %v847
          %v849 = vmul.f32 %v819, 1.442695
          %v850 = vpow.pop %v849
          %v851 = vmul.f32 %v820, 1.442695
          %v852 = vpow.pop %v851
          %v853 = vld [vmem:[#allocation3] sm:$0xff]
          %v854 = vld [vmem:[#allocation3 + $0x8] sm:$0xff]
          %855 = vmatpush.msra.mxu0 %v852
          %856 = vmatpush.msra.mxu0 %v850
          %857 = vmatpush.msra.mxu0 %v848
          %858 = vmatpush.msra.mxu0 %v846
          %859 = vmatpush.msra.mxu0 %v844
          %860 = vmatpush.msra.mxu0 %v842
          %861 = vmatpush.msra.mxu0 %v840
          %862 = vmatpush.msra.mxu0 %v838
          %863 = vmatpush.msra.mxu0 %v836
          %864 = vmatpush.msra.mxu0 %v834
          %865 = vmatpush.msra.mxu0 %v832
          %866 = vmatpush.msra.mxu0 %v830
          %867 = vmatpush.msra.mxu0 %v828
          %868 = vmatpush.msra.mxu0 %v826
          %869 = vmatpush.msra.mxu0 %v824
          %870 = vmatpush.msra.mxu0 %v822
          %871 = vmatmul.f32.gmra.mxu0 %v334
          %v872 = vpop.f32.mrf.mxu0
          %v873 = vadd.f32 0.0, %v872
          %874 = vmatmul.f32.gmra.mxu0 %v335
          %v875 = vpop.f32.mrf.mxu0
          %v876 = vadd.f32 0.0, %v875
          %877 = vdwg.mxu0
          %v878 = vadd.f32 %v853, %v873
          %v879 = vadd.f32 %v854, %v876
          %vm880 = vcmask 31744
          %881 = vst.msk [vmem:[#allocation3] sm:$0xff] %vm880, %v878
          %882 = vst.msk [vmem:[#allocation3 + $0x8] sm:$0xff] %vm880, %v879
          %884 = vset.pattern.permute.xlu0 0
          %885 = vperm.xlu0 %884, %v822
          %v886 = vpop.permute.xlu0 %885
          %889 = vset.pattern.permute.xlu0 0
          %890 = vperm.xlu0 %889, %v824
          %v891 = vpop.permute.xlu0 %890
          %894 = vset.pattern.permute.xlu0 0
          %895 = vperm.xlu0 %894, %v826
          %v896 = vpop.permute.xlu0 %895
          %899 = vset.pattern.permute.xlu0 0
          %900 = vperm.xlu0 %899, %v828
          %v901 = vpop.permute.xlu0 %900
          %904 = vset.pattern.permute.xlu0 0
          %905 = vperm.xlu0 %904, %v830
          %v906 = vpop.permute.xlu0 %905
          %909 = vset.pattern.permute.xlu0 0
          %910 = vperm.xlu0 %909, %v832
          %v911 = vpop.permute.xlu0 %910
          %914 = vset.pattern.permute.xlu0 0
          %915 = vperm.xlu0 %914, %v834
          %v916 = vpop.permute.xlu0 %915
          %919 = vset.pattern.permute.xlu0 0
          %920 = vperm.xlu0 %919, %v836
          %v921 = vpop.permute.xlu0 %920
          %924 = vset.pattern.permute.xlu0 0
          %925 = vperm.xlu0 %924, %v838
          %v926 = vpop.permute.xlu0 %925
          %929 = vset.pattern.permute.xlu0 0
          %930 = vperm.xlu0 %929, %v840
          %v931 = vpop.permute.xlu0 %930
          %934 = vset.pattern.permute.xlu0 0
          %935 = vperm.xlu0 %934, %v842
          %v936 = vpop.permute.xlu0 %935
          %939 = vset.pattern.permute.xlu0 0
          %940 = vperm.xlu0 %939, %v844
          %v941 = vpop.permute.xlu0 %940
          %944 = vset.pattern.permute.xlu0 0
          %945 = vperm.xlu0 %944, %v846
          %v946 = vpop.permute.xlu0 %945
          %949 = vset.pattern.permute.xlu0 0
          %950 = vperm.xlu0 %949, %v848
          %v951 = vpop.permute.xlu0 %950
          %954 = vset.pattern.permute.xlu0 0
          %955 = vperm.xlu0 %954, %v850
          %v956 = vpop.permute.xlu0 %955
          %959 = vset.pattern.permute.xlu0 0
          %960 = vperm.xlu0 %959, %v852
          %v961 = vpop.permute.xlu0 %960
          %v963 = vmul.f32 %v886, %v465
          %v964 = vmul.f32 %v891, %v468
          %v965 = vmul.f32 %v896, %v471
          %v966 = vmul.f32 %v901, %v474
          %v967 = vmul.f32 %v906, %v477
          %v968 = vmul.f32 %v911, %v480
          %v969 = vmul.f32 %v916, %v483
          %v970 = vmul.f32 %v921, %v486
          %v971 = vmul.f32 %v926, %v489
          %v972 = vmul.f32 %v931, %v492
          %v973 = vmul.f32 %v936, %v495
          %v974 = vmul.f32 %v941, %v498
          %v975 = vmul.f32 %v946, %v501
          %v976 = vmul.f32 %v951, %v504
          %v977 = vmul.f32 %v956, %v507
          %v978 = vmul.f32 %v961, %v510
          %979 = vset.pattern.permute.xlu0 1
          %980 = vperm.xlu0 %979, %v822
          %v981 = vpop.permute.xlu0 %980
          %983 = vset.pattern.permute.xlu0 1
          %984 = vperm.xlu0 %983, %v824
          %v985 = vpop.permute.xlu0 %984
          %987 = vset.pattern.permute.xlu0 1
          %988 = vperm.xlu0 %987, %v826
          %v989 = vpop.permute.xlu0 %988
          %991 = vset.pattern.permute.xlu0 1
          %992 = vperm.xlu0 %991, %v828
          %v993 = vpop.permute.xlu0 %992
          %995 = vset.pattern.permute.xlu0 1
          %996 = vperm.xlu0 %995, %v830
          %v997 = vpop.permute.xlu0 %996
          %999 = vset.pattern.permute.xlu0 1
          %1000 = vperm.xlu0 %999, %v832
          %v1001 = vpop.permute.xlu0 %1000
          %1003 = vset.pattern.permute.xlu0 1
          %1004 = vperm.xlu0 %1003, %v834
          %v1005 = vpop.permute.xlu0 %1004
          %1007 = vset.pattern.permute.xlu0 1
          %1008 = vperm.xlu0 %1007, %v836
          %v1009 = vpop.permute.xlu0 %1008
          %1011 = vset.pattern.permute.xlu0 1
          %1012 = vperm.xlu0 %1011, %v838
          %v1013 = vpop.permute.xlu0 %1012
          %1015 = vset.pattern.permute.xlu0 1
          %1016 = vperm.xlu0 %1015, %v840
          %v1017 = vpop.permute.xlu0 %1016
          %1019 = vset.pattern.permute.xlu0 1
          %1020 = vperm.xlu0 %1019, %v842
          %v1021 = vpop.permute.xlu0 %1020
          %1023 = vset.pattern.permute.xlu0 1
          %1024 = vperm.xlu0 %1023, %v844
          %v1025 = vpop.permute.xlu0 %1024
          %1027 = vset.pattern.permute.xlu0 1
          %1028 = vperm.xlu0 %1027, %v846
          %v1029 = vpop.permute.xlu0 %1028
          %1031 = vset.pattern.permute.xlu0 1
          %1032 = vperm.xlu0 %1031, %v848
          %v1033 = vpop.permute.xlu0 %1032
          %1035 = vset.pattern.permute.xlu0 1
          %1036 = vperm.xlu0 %1035, %v850
          %v1037 = vpop.permute.xlu0 %1036
          %1039 = vset.pattern.permute.xlu0 1
          %1040 = vperm.xlu0 %1039, %v852
          %v1041 = vpop.permute.xlu0 %1040
          %v1043 = vmul.f32 %v981, %v465
          %v1044 = vmul.f32 %v985, %v468
          %v1045 = vmul.f32 %v989, %v471
          %v1046 = vmul.f32 %v993, %v474
          %v1047 = vmul.f32 %v997, %v477
          %v1048 = vmul.f32 %v1001, %v480
          %v1049 = vmul.f32 %v1005, %v483
          %v1050 = vmul.f32 %v1009, %v486
          %v1051 = vmul.f32 %v1013, %v489
          %v1052 = vmul.f32 %v1017, %v492
          %v1053 = vmul.f32 %v1021, %v495
          %v1054 = vmul.f32 %v1025, %v498
          %v1055 = vmul.f32 %v1029, %v501
          %v1056 = vmul.f32 %v1033, %v504
          %v1057 = vmul.f32 %v1037, %v507
          %v1058 = vmul.f32 %v1041, %v510
          %1059 = vset.pattern.permute.xlu0 2
          %1060 = vperm.xlu0 %1059, %v822
          %v1061 = vpop.permute.xlu0 %1060
          %1063 = vset.pattern.permute.xlu0 2
          %1064 = vperm.xlu0 %1063, %v824
          %v1065 = vpop.permute.xlu0 %1064
          %1067 = vset.pattern.permute.xlu0 2
          %1068 = vperm.xlu0 %1067, %v826
          %v1069 = vpop.permute.xlu0 %1068
          %1071 = vset.pattern.permute.xlu0 2
          %1072 = vperm.xlu0 %1071, %v828
          %v1073 = vpop.permute.xlu0 %1072
          %1075 = vset.pattern.permute.xlu0 2
          %1076 = vperm.xlu0 %1075, %v830
          %v1077 = vpop.permute.xlu0 %1076
          %1079 = vset.pattern.permute.xlu0 2
          %1080 = vperm.xlu0 %1079, %v832
          %v1081 = vpop.permute.xlu0 %1080
          %1083 = vset.pattern.permute.xlu0 2
          %1084 = vperm.xlu0 %1083, %v834
          %v1085 = vpop.permute.xlu0 %1084
          %1087 = vset.pattern.permute.xlu0 2
          %1088 = vperm.xlu0 %1087, %v836
          %v1089 = vpop.permute.xlu0 %1088
          %1091 = vset.pattern.permute.xlu0 2
          %1092 = vperm.xlu0 %1091, %v838
          %v1093 = vpop.permute.xlu0 %1092
          %1095 = vset.pattern.permute.xlu0 2
          %1096 = vperm.xlu0 %1095, %v840
          %v1097 = vpop.permute.xlu0 %1096
          %1099 = vset.pattern.permute.xlu0 2
          %1100 = vperm.xlu0 %1099, %v842
          %v1101 = vpop.permute.xlu0 %1100
          %1103 = vset.pattern.permute.xlu0 2
          %1104 = vperm.xlu0 %1103, %v844
          %v1105 = vpop.permute.xlu0 %1104
          %1107 = vset.pattern.permute.xlu0 2
          %1108 = vperm.xlu0 %1107, %v846
          %v1109 = vpop.permute.xlu0 %1108
          %1111 = vset.pattern.permute.xlu0 2
          %1112 = vperm.xlu0 %1111, %v848
          %v1113 = vpop.permute.xlu0 %1112
          %1115 = vset.pattern.permute.xlu0 2
          %1116 = vperm.xlu0 %1115, %v850
          %v1117 = vpop.permute.xlu0 %1116
          %1119 = vset.pattern.permute.xlu0 2
          %1120 = vperm.xlu0 %1119, %v852
          %v1121 = vpop.permute.xlu0 %1120
          %v1123 = vmul.f32 %v1061, %v465
          %v1124 = vmul.f32 %v1065, %v468
          %v1125 = vmul.f32 %v1069, %v471
          %v1126 = vmul.f32 %v1073, %v474
          %v1127 = vmul.f32 %v1077, %v477
          %v1128 = vmul.f32 %v1081, %v480
          %v1129 = vmul.f32 %v1085, %v483
          %v1130 = vmul.f32 %v1089, %v486
          %v1131 = vmul.f32 %v1093, %v489
          %v1132 = vmul.f32 %v1097, %v492
          %v1133 = vmul.f32 %v1101, %v495
          %v1134 = vmul.f32 %v1105, %v498
          %v1135 = vmul.f32 %v1109, %v501
          %v1136 = vmul.f32 %v1113, %v504
          %v1137 = vmul.f32 %v1117, %v507
          %v1138 = vmul.f32 %v1121, %v510
          %1139 = vset.pattern.permute.xlu0 3
          %1140 = vperm.xlu0 %1139, %v822
          %v1141 = vpop.permute.xlu0 %1140
          %1143 = vset.pattern.permute.xlu0 3
          %1144 = vperm.xlu0 %1143, %v824
          %v1145 = vpop.permute.xlu0 %1144
          %1147 = vset.pattern.permute.xlu0 3
          %1148 = vperm.xlu0 %1147, %v826
          %v1149 = vpop.permute.xlu0 %1148
          %1151 = vset.pattern.permute.xlu0 3
          %1152 = vperm.xlu0 %1151, %v828
          %v1153 = vpop.permute.xlu0 %1152
          %1155 = vset.pattern.permute.xlu0 3
          %1156 = vperm.xlu0 %1155, %v830
          %v1157 = vpop.permute.xlu0 %1156
          %1159 = vset.pattern.permute.xlu0 3
          %1160 = vperm.xlu0 %1159, %v832
          %v1161 = vpop.permute.xlu0 %1160
          %1163 = vset.pattern.permute.xlu0 3
          %1164 = vperm.xlu0 %1163, %v834
          %v1165 = vpop.permute.xlu0 %1164
          %1167 = vset.pattern.permute.xlu0 3
          %1168 = vperm.xlu0 %1167, %v836
          %v1169 = vpop.permute.xlu0 %1168
          %1171 = vset.pattern.permute.xlu0 3
          %1172 = vperm.xlu0 %1171, %v838
          %v1173 = vpop.permute.xlu0 %1172
          %1175 = vset.pattern.permute.xlu0 3
          %1176 = vperm.xlu0 %1175, %v840
          %v1177 = vpop.permute.xlu0 %1176
          %1179 = vset.pattern.permute.xlu0 3
          %1180 = vperm.xlu0 %1179, %v842
          %v1181 = vpop.permute.xlu0 %1180
          %1183 = vset.pattern.permute.xlu0 3
          %1184 = vperm.xlu0 %1183, %v844
          %v1185 = vpop.permute.xlu0 %1184
          %1187 = vset.pattern.permute.xlu0 3
          %1188 = vperm.xlu0 %1187, %v846
          %v1189 = vpop.permute.xlu0 %1188
          %1191 = vset.pattern.permute.xlu0 3
          %1192 = vperm.xlu0 %1191, %v848
          %v1193 = vpop.permute.xlu0 %1192
          %1195 = vset.pattern.permute.xlu0 3
          %1196 = vperm.xlu0 %1195, %v850
          %v1197 = vpop.permute.xlu0 %1196
          %1199 = vset.pattern.permute.xlu0 3
          %1200 = vperm.xlu0 %1199, %v852
          %v1201 = vpop.permute.xlu0 %1200
          %v1203 = vmul.f32 %v1141, %v465
          %v1204 = vmul.f32 %v1145, %v468
          %v1205 = vmul.f32 %v1149, %v471
          %v1206 = vmul.f32 %v1153, %v474
          %v1207 = vmul.f32 %v1157, %v477
          %v1208 = vmul.f32 %v1161, %v480
          %v1209 = vmul.f32 %v1165, %v483
          %v1210 = vmul.f32 %v1169, %v486
          %v1211 = vmul.f32 %v1173, %v489
          %v1212 = vmul.f32 %v1177, %v492
          %v1213 = vmul.f32 %v1181, %v495
          %v1214 = vmul.f32 %v1185, %v498
          %v1215 = vmul.f32 %v1189, %v501
          %v1216 = vmul.f32 %v1193, %v504
          %v1217 = vmul.f32 %v1197, %v507
          %v1218 = vmul.f32 %v1201, %v510
          %1235 = vrot.lane.b32.xlu0 %v1043, 32
          %v1236 = vpop.permute.xlu0 %1235
          %1237 = vrot.lane.b32.xlu0 %v1044, 32
          %v1238 = vpop.permute.xlu0 %1237
          %1239 = vrot.lane.b32.xlu0 %v1045, 32
          %v1240 = vpop.permute.xlu0 %1239
          %1241 = vrot.lane.b32.xlu0 %v1046, 32
          %v1242 = vpop.permute.xlu0 %1241
          %1243 = vrot.lane.b32.xlu0 %v1047, 32
          %v1244 = vpop.permute.xlu0 %1243
          %1245 = vrot.lane.b32.xlu0 %v1048, 32
          %v1246 = vpop.permute.xlu0 %1245
          %1247 = vrot.lane.b32.xlu0 %v1049, 32
          %v1248 = vpop.permute.xlu0 %1247
          %1249 = vrot.lane.b32.xlu0 %v1050, 32
          %v1250 = vpop.permute.xlu0 %1249
          %1251 = vrot.lane.b32.xlu0 %v1051, 32
          %v1252 = vpop.permute.xlu0 %1251
          %1253 = vrot.lane.b32.xlu0 %v1052, 32
          %v1254 = vpop.permute.xlu0 %1253
          %1255 = vrot.lane.b32.xlu0 %v1053, 32
          %v1256 = vpop.permute.xlu0 %1255
          %1257 = vrot.lane.b32.xlu0 %v1054, 32
          %v1258 = vpop.permute.xlu0 %1257
          %1259 = vrot.lane.b32.xlu0 %v1055, 32
          %v1260 = vpop.permute.xlu0 %1259
          %1261 = vrot.lane.b32.xlu0 %v1056, 32
          %v1262 = vpop.permute.xlu0 %1261
          %1263 = vrot.lane.b32.xlu0 %v1057, 32
          %v1264 = vpop.permute.xlu0 %1263
          %1265 = vrot.lane.b32.xlu0 %v1058, 32
          %v1266 = vpop.permute.xlu0 %1265
          %1299 = vrot.lane.b32.xlu0 %v1123, 64
          %v1300 = vpop.permute.xlu0 %1299
          %1301 = vrot.lane.b32.xlu0 %v1124, 64
          %v1302 = vpop.permute.xlu0 %1301
          %1303 = vrot.lane.b32.xlu0 %v1125, 64
          %v1304 = vpop.permute.xlu0 %1303
          %1305 = vrot.lane.b32.xlu0 %v1126, 64
          %v1306 = vpop.permute.xlu0 %1305
          %1307 = vrot.lane.b32.xlu0 %v1127, 64
          %v1308 = vpop.permute.xlu0 %1307
          %1309 = vrot.lane.b32.xlu0 %v1128, 64
          %v1310 = vpop.permute.xlu0 %1309
          %1311 = vrot.lane.b32.xlu0 %v1129, 64
          %v1312 = vpop.permute.xlu0 %1311
          %1313 = vrot.lane.b32.xlu0 %v1130, 64
          %v1314 = vpop.permute.xlu0 %1313
          %1315 = vrot.lane.b32.xlu0 %v1131, 64
          %v1316 = vpop.permute.xlu0 %1315
          %1317 = vrot.lane.b32.xlu0 %v1132, 64
          %v1318 = vpop.permute.xlu0 %1317
          %1319 = vrot.lane.b32.xlu0 %v1133, 64
          %v1320 = vpop.permute.xlu0 %1319
          %1321 = vrot.lane.b32.xlu0 %v1134, 64
          %v1322 = vpop.permute.xlu0 %1321
          %1323 = vrot.lane.b32.xlu0 %v1135, 64
          %v1324 = vpop.permute.xlu0 %1323
          %1325 = vrot.lane.b32.xlu0 %v1136, 64
          %v1326 = vpop.permute.xlu0 %1325
          %1327 = vrot.lane.b32.xlu0 %v1137, 64
          %v1328 = vpop.permute.xlu0 %1327
          %1329 = vrot.lane.b32.xlu0 %v1138, 64
          %v1330 = vpop.permute.xlu0 %1329
          %1363 = vrot.lane.b32.xlu0 %v1203, 96
          %v1364 = vpop.permute.xlu0 %1363
          %1365 = vrot.lane.b32.xlu0 %v1204, 96
          %v1366 = vpop.permute.xlu0 %1365
          %1367 = vrot.lane.b32.xlu0 %v1205, 96
          %v1368 = vpop.permute.xlu0 %1367
          %1369 = vrot.lane.b32.xlu0 %v1206, 96
          %v1370 = vpop.permute.xlu0 %1369
          %1371 = vrot.lane.b32.xlu0 %v1207, 96
          %v1372 = vpop.permute.xlu0 %1371
          %1373 = vrot.lane.b32.xlu0 %v1208, 96
          %v1374 = vpop.permute.xlu0 %1373
          %1375 = vrot.lane.b32.xlu0 %v1209, 96
          %v1376 = vpop.permute.xlu0 %1375
          %1377 = vrot.lane.b32.xlu0 %v1210, 96
          %v1378 = vpop.permute.xlu0 %1377
          %1379 = vrot.lane.b32.xlu0 %v1211, 96
          %v1380 = vpop.permute.xlu0 %1379
          %1381 = vrot.lane.b32.xlu0 %v1212, 96
          %v1382 = vpop.permute.xlu0 %1381
          %1383 = vrot.lane.b32.xlu0 %v1213, 96
          %v1384 = vpop.permute.xlu0 %1383
          %1385 = vrot.lane.b32.xlu0 %v1214, 96
          %v1386 = vpop.permute.xlu0 %1385
          %1387 = vrot.lane.b32.xlu0 %v1215, 96
          %v1388 = vpop.permute.xlu0 %1387
          %1389 = vrot.lane.b32.xlu0 %v1216, 96
          %v1390 = vpop.permute.xlu0 %1389
          %1391 = vrot.lane.b32.xlu0 %v1217, 96
          %v1392 = vpop.permute.xlu0 %1391
          %1393 = vrot.lane.b32.xlu0 %v1218, 96
          %v1394 = vpop.permute.xlu0 %1393
          %vm1411 = vcmask 261120
          %v1412 = vsel %vm1411, %v963, %v1236
          %v1413 = vsel %vm1411, %v964, %v1238
          %v1414 = vsel %vm1411, %v965, %v1240
          %v1415 = vsel %vm1411, %v966, %v1242
          %v1416 = vsel %vm1411, %v967, %v1244
          %v1417 = vsel %vm1411, %v968, %v1246
          %v1418 = vsel %vm1411, %v969, %v1248
          %v1419 = vsel %vm1411, %v970, %v1250
          %v1420 = vsel %vm1411, %v971, %v1252
          %v1421 = vsel %vm1411, %v972, %v1254
          %v1422 = vsel %vm1411, %v973, %v1256
          %v1423 = vsel %vm1411, %v974, %v1258
          %v1424 = vsel %vm1411, %v975, %v1260
          %v1425 = vsel %vm1411, %v976, %v1262
          %v1426 = vsel %vm1411, %v977, %v1264
          %v1427 = vsel %vm1411, %v978, %v1266
          %vm1428 = vcmask 523264
          %v1429 = vsel %vm1428, %v1412, %v1300
          %v1430 = vsel %vm1428, %v1413, %v1302
          %v1431 = vsel %vm1428, %v1414, %v1304
          %v1432 = vsel %vm1428, %v1415, %v1306
          %v1433 = vsel %vm1428, %v1416, %v1308
          %v1434 = vsel %vm1428, %v1417, %v1310
          %v1435 = vsel %vm1428, %v1418, %v1312
          %v1436 = vsel %vm1428, %v1419, %v1314
          %v1437 = vsel %vm1428, %v1420, %v1316
          %v1438 = vsel %vm1428, %v1421, %v1318
          %v1439 = vsel %vm1428, %v1422, %v1320
          %v1440 = vsel %vm1428, %v1423, %v1322
          %v1441 = vsel %vm1428, %v1424, %v1324
          %v1442 = vsel %vm1428, %v1425, %v1326
          %v1443 = vsel %vm1428, %v1426, %v1328
          %v1444 = vsel %vm1428, %v1427, %v1330
          %vm1445 = vcmask 785408
          %v1446 = vsel %vm1445, %v1429, %v1364
          %v1447 = vsel %vm1445, %v1430, %v1366
          %v1448 = vsel %vm1445, %v1431, %v1368
          %v1449 = vsel %vm1445, %v1432, %v1370
          %v1450 = vsel %vm1445, %v1433, %v1372
          %v1451 = vsel %vm1445, %v1434, %v1374
          %v1452 = vsel %vm1445, %v1435, %v1376
          %v1453 = vsel %vm1445, %v1436, %v1378
          %v1454 = vsel %vm1445, %v1437, %v1380
          %v1455 = vsel %vm1445, %v1438, %v1382
          %v1456 = vsel %vm1445, %v1439, %v1384
          %v1457 = vsel %vm1445, %v1440, %v1386
          %v1458 = vsel %vm1445, %v1441, %v1388
          %v1459 = vsel %vm1445, %v1442, %v1390
          %v1460 = vsel %vm1445, %v1443, %v1392
          %v1461 = vsel %vm1445, %v1444, %v1394
          %v1462 = vld [vmem:[#allocation8] sm:$0xff]
          %v1463 = vld [vmem:[#allocation8 + $0x8] sm:$0xff]
          %1464 = vmatpush.msra.mxu0 %v1461
          %1465 = vmatpush.msra.mxu0 %v1460
          %1466 = vmatpush.msra.mxu0 %v1459
          %1467 = vmatpush.msra.mxu0 %v1458
          %1468 = vmatpush.msra.mxu0 %v1457
          %1469 = vmatpush.msra.mxu0 %v1456
          %1470 = vmatpush.msra.mxu0 %v1455
          %1471 = vmatpush.msra.mxu0 %v1454
          %1472 = vmatpush.msra.mxu0 %v1453
          %1473 = vmatpush.msra.mxu0 %v1452
          %1474 = vmatpush.msra.mxu0 %v1451
          %1475 = vmatpush.msra.mxu0 %v1450
          %1476 = vmatpush.msra.mxu0 %v1449
          %1477 = vmatpush.msra.mxu0 %v1448
          %1478 = vmatpush.msra.mxu0 %v1447
          %1479 = vmatpush.msra.mxu0 %v1446
          %1480 = vmatmul.f32.gmra.mxu0 %v334
          %v1481 = vpop.f32.mrf.mxu0
          %v1482 = vadd.f32 0.0, %v1481
          %1483 = vmatmul.f32.gmra.mxu0 %v335
          %v1484 = vpop.f32.mrf.mxu0
          %v1485 = vadd.f32 0.0, %v1484
          %1486 = vdwg.mxu0
          %v1487 = vadd.f32 %v1462, %v1482
          %v1488 = vadd.f32 %v1463, %v1485
          %1489 = vst [vmem:[#allocation8] sm:$0xff] %v1487
          %1490 = vst [vmem:[#allocation8 + $0x8] sm:$0xff] %v1488
        $region98: #{tpu_custom_call.1} parent=73 // pred_fallthru
          _
        %p1491 = scmp.eq.s32.totalorder %s25, 1
        %p1492 = pnand %p418, %p1491
        %p1493 = pneg %p1492
        // Predicated region
        $region99: #{tpu_custom_call.1} parent=73 // pred_check
          _
        $region100: #{tpu_custom_call.1} parent=73 // pred_check_branch
          %1495 = sbr.rel (%p1492) target = $region102
        $region101: #{tpu_custom_call.1} parent=73 // pred_region
          %v1496 = vld [vmem:[#allocation3] sm:$0xff]
          %v1497 = vld [vmem:[#allocation3 + $0x8] sm:$0xff]
          %vm1498 = vcmp.gt.f32.partialorder %v1496, 0.0
          %vm1499 = vcmp.gt.f32.partialorder %v1497, 0.0
          %v1500 = vrcp.pop %v1496
          %v1501 = vmul.f32 %v1496, %v1500
          %v1502 = vsub.f32 1.0, %v1501
          %v1503 = vmul.f32 %v1500, %v1502
          %v1504 = vadd.f32 %v1500, %v1503
          %vm1505 = vweird.f32 %v1496
          %vm1506 = vweird.f32 %v1500
          %vm1507 = vmor %vm1505, %vm1506
          %v1508 = vsel %vm1507, %v1500, %v1504
          %v1509 = vand.u32 2147483647, %v1496
          %vm1510 = vcmp.eq.f32.partialorder %v1509, 8.507059e+37
          %v1511 = vand.u32 %v1496, 2147483648
          %v1512 = vor.u32 1.1754944e-38, %v1511
          %v1513 = vsel %vm1510, %v1512, %v1508
          %v1514 = vmul.f32 1.0, %v1513
          %v1515 = vrcp.pop %v1497
          %v1516 = vmul.f32 %v1497, %v1515
          %v1517 = vsub.f32 1.0, %v1516
          %v1518 = vmul.f32 %v1515, %v1517
          %v1519 = vadd.f32 %v1515, %v1518
          %vm1520 = vweird.f32 %v1497
          %vm1521 = vweird.f32 %v1515
          %vm1522 = vmor %vm1520, %vm1521
          %v1523 = vsel %vm1522, %v1515, %v1519
          %v1524 = vand.u32 2147483647, %v1497
          %vm1525 = vcmp.eq.f32.partialorder %v1524, 8.507059e+37
          %v1526 = vand.u32 %v1497, 2147483648
          %v1527 = vor.u32 1.1754944e-38, %v1526
          %v1528 = vsel %vm1525, %v1527, %v1523
          %v1529 = vmul.f32 1.0, %v1528
          %v1530 = vsel %vm1498, %v1514, 0.0
          %v1531 = vsel %vm1499, %v1529, 0.0
          %v1532 = vld [vmem:[#allocation8] sm:$0xff]
          %v1533 = vld [vmem:[#allocation8 + $0x8] sm:$0xff]
          %1535 = vset.pattern.permute.xlu0 0
          %1536 = vperm.xlu0 %1535, %v1530
          %v1537 = vpop.permute.xlu0 %1536
          %1540 = vset.pattern.permute.xlu0 0
          %1541 = vperm.xlu0 %1540, %v1531
          %v1542 = vpop.permute.xlu0 %1541
          %v1544 = vmul.f32 %v1532, %v1537
          %v1545 = vmul.f32 %v1533, %v1542
          %1546 = vset.pattern.permute.xlu0 1
          %1547 = vperm.xlu0 %1546, %v1530
          %v1548 = vpop.permute.xlu0 %1547
          %1550 = vset.pattern.permute.xlu0 1
          %1551 = vperm.xlu0 %1550, %v1531
          %v1552 = vpop.permute.xlu0 %1551
          %v1554 = vmul.f32 %v1532, %v1548
          %v1555 = vmul.f32 %v1533, %v1552
          %1556 = vset.pattern.permute.xlu0 2
          %1557 = vperm.xlu0 %1556, %v1530
          %v1558 = vpop.permute.xlu0 %1557
          %1560 = vset.pattern.permute.xlu0 2
          %1561 = vperm.xlu0 %1560, %v1531
          %v1562 = vpop.permute.xlu0 %1561
          %v1564 = vmul.f32 %v1532, %v1558
          %v1565 = vmul.f32 %v1533, %v1562
          %1566 = vset.pattern.permute.xlu0 3
          %1567 = vperm.xlu0 %1566, %v1530
          %v1568 = vpop.permute.xlu0 %1567
          %1570 = vset.pattern.permute.xlu0 3
          %1571 = vperm.xlu0 %1570, %v1531
          %v1572 = vpop.permute.xlu0 %1571
          %v1574 = vmul.f32 %v1532, %v1568
          %v1575 = vmul.f32 %v1533, %v1572
          %vm1576 = vcmask 261120
          %v1577 = vsel %vm1576, %v1544, %v1554
          %v1578 = vsel %vm1576, %v1545, %v1555
          %vm1579 = vcmask 523264
          %v1580 = vsel %vm1579, %v1577, %v1564
          %v1581 = vsel %vm1579, %v1578, %v1565
          %vm1582 = vcmask 785408
          %v1583 = vsel %vm1582, %v1580, %v1574
          %v1584 = vsel %vm1582, %v1581, %v1575
          %1585 = vst [vmem:[#allocation8] sm:$0xff] %v1583
          %1586 = vst [vmem:[#allocation8 + $0x8] sm:$0xff] %v1584
        $region102: #{tpu_custom_call.1} parent=73 // pred_fallthru
          _
        // Predicated region
        $region103: #{tpu_custom_call.1} parent=73 // pred_check
          %p1587 = pneg %p172
        $region104: #{tpu_custom_call.1} parent=73 // pred_check_branch
          %1589 = sbr.rel (%p1587) target = $region106
        $region105: #{tpu_custom_call.1} parent=73 // pred_region
          %s1590 = smul.u32 2, %s23
          %1592 = vsyncadd [#allocation7], 0
          %s1593 = smul.addr %s1590, 8
          %s1594 = scalar_lea.hbm %s5, %s1593
          %s1595 = sshll.u32 [#allocation8], 4
          %s1596 = int_to_ptr.vmem [resolvable:$true] %s1595
          %s1597 = sshll.u32 %s1594, 4
          %s1598 = int_to_ptr.hbm [resolvable:$true] %s1597
          %1603 = dma.vmem_to_hbm [thread:$0]  %s1596, 256, %s1598, [#allocation7], 128, 128, 8
        $region106: #{tpu_custom_call.1} parent=73 // pred_fallthru
          _
        // Predicated region
        $region107: #{tpu_custom_call.1} parent=73 // pred_check
          %p1604 = pneg %p172
        $region108: #{tpu_custom_call.1} parent=73 // pred_check_branch
          %1606 = sbr.rel (%p1604) target = $region110
        $region109: #{tpu_custom_call.1} parent=73 // pred_region
          %1608 = dma.done [#allocation7], 256
        $region110: #{tpu_custom_call.1} parent=73 // pred_fallthru
          _
      $region74: #{tpu_custom_call.1} parent=5 // pred_fallthru
        _
      %p1609 = scmp.le.s32.totalorder 2, %s13
      // Predicated region
      $region111: #{tpu_custom_call.1} parent=5 // pred_check
        %p1610 = pneg %p1609
      $region112: #{tpu_custom_call.1} parent=5 // pred_check_branch
        %1612 = sbr.rel (%p1610) target = $region114
      $region113: #{tpu_custom_call.1} parent=5 // pred_region
        %s1613 = ssub.s32 %s13, 2
      $region114: #{tpu_custom_call.1} parent=5 // pred_fallthru
        _
    $region6: #{tpu_custom_call.1} parent=1 // loop_footer
      %s17 = sadd.s32 1, %s13
    $region7: #{tpu_custom_call.1} parent=1 // loop_footer_branch
      %12 = sbr.rel target = $region3
    $region8: #{tpu_custom_call.1} parent=1 // loop_exit
      _
    %1614 = vsyncpa [#allocation6], 1
    %s1615 = scalar_lea.sflag [#allocation6], 1
    %1616 = vsyncpa %s1615, 1
    %1617 = vsyncpa [#allocation7], 1
    %s1618 = scalar_lea.sflag [#allocation7], 1
    %1619 = vsyncpa %s1618, 1

</llo_original>
